<compile_context>
chip_gen: v7x
topology: tpu7x:2x2x1
jax: 0.10.0
libtpu: 0.0.40
codegen_flags: <defaults>
</compile_context>

<pallas_src>
import functools
import math

import jax
import jax.numpy as jnp
import numpy as np
from jax.experimental import pallas as pl
from jax.experimental.pallas import tpu as pltpu

EPS = 1e-11


def _gaussian_3x3():
    """The fixed gaussian kernel built in Cooc_Layer.__init__ (python floats)."""
    mean, var = 1.0, 0.5 ** 2
    return tuple(
        tuple(
            (1.0 / (2.0 * math.pi * var))
            * math.exp(-(((j - mean) ** 2) + ((i - mean) ** 2)) / (2.0 * var))
            for j in range(3)
        )
        for i in range(3)
    )


def _roll_fwd(x, t):
    """Circular shift by +t along the last axis of a 2D value.

    Bit-exact with the torch module's roll() (== jnp.roll(x, t, axis=-1)):
    result[:, k] = x[:, (k - t) mod N].  Implemented with static lane slices
    so the shift direction cannot silently flip.
    """
    n = x.shape[-1]
    t = t % n
    if t == 0:
        return x
    return jnp.concatenate([x[:, n - t:], x[:, :n - t]], axis=1)


def _roll_bwd(x, t):
    """Circular shift by -t along the last axis of a 2D value."""
    n = x.shape[-1]
    t = t % n
    if t == 0:
        return x
    return jnp.concatenate([x[:, t:], x[:, :t]], axis=1)


def _pick_group(n, max_group=16):
    """Largest divisor of n that is <= max_group (shifts streamed per step)."""
    g = min(n, max_group)
    while n % g:
        g -= 1
    return g


# ---------------------------------------------------------------------------
# Fused kernel:
#   grid = (batch, shift_group)
#   inputs : x (1, Cin, H, W) VMEM block, w1 (Cout, Cin) SMEM scalar table
#   output : c_ij (1, 1, Cout*Cout), written on the last shift group
#   scratch: xroll (C, N), xcols (C, N), resp (C, C, N)  -- all VMEM, carried
#            across the "arbitrary" shift axis (re-initialized at group 0).
# ---------------------------------------------------------------------------
def _cooc_kernel(x_ref, w_ref, o_ref, xroll_sc, xcols_sc, resp_sc, *,
                 gauss, cin, cout, hout, wout, n, grp, ngrp):
    g = pl.program_id(1)
    c2 = cout * cout

    # ----- shift group 0: fused conv1x1 + ReLU + gaussian depthwise --------
    @pl.when(g == 0)
    def _init():
        resp_sc[...] = jnp.zeros_like(resp_sc)
        xs = [x_ref[0, ci, :, :] for ci in range(cin)]          # each (H, W)
        for co in range(cout):
            # 1x1 conv as VPU broadcast-MACs over the SMEM scalar table.
            acc = w_ref[co, 0] * xs[0]
            for ci in range(1, cin):
                acc = acc + w_ref[co, ci] * xs[ci]
            y1 = jnp.maximum(acc, 0.0)                          # ReLU, (H, W)
            # 3x3 gaussian, valid padding -> (hout, wout)
            y2 = gauss[0][0] * y1[0:hout, 0:wout]
            for ki in range(3):
                for kj in range(3):
                    if ki == 0 and kj == 0:
                        continue
                    y2 = y2 + gauss[ki][kj] * y1[ki:ki + hout, kj:kj + wout]
            # Row-major flatten (torch .view(b, c, h*w)) straight into the
            # (C, N) VMEM scratch -- no HBM writeback, no transpose glue.
            for i in range(hout):
                xroll_sc[co:co + 1, i * wout:(i + 1) * wout] = y2[i:i + 1, :]
        xcols_sc[...] = xroll_sc[...]

    # ----- stream this group's G shifts -------------------------------------
    # Invariants with p0 = g*grp:
    #   xroll_sc == roll_{+p0}(xf)  => _roll_fwd(xroll, t) == roll_{p0+t}(xf)
    #   xcols_sc == roll_{-p0}(xf)  => xcols[:, t]         == xf[:, p0+t]
    xr = xroll_sc[...]                                          # (C, N)
    xc = xcols_sc[...]                                          # (C, N)
    rolled = [_roll_fwd(xr, t) for t in range(grp)]             # G x (C, N)
    for co in range(cout):
        acc = resp_sc[co]                                       # (C, N)
        for t in range(grp):
            # resp[co, j, m] += xf[co, p0+t] * roll_{p0+t}(xf)[j, m]
            acc = acc + xc[co:co + 1, t:t + 1] * rolled[t]
        resp_sc[co] = acc
    # Advance the carried rolls for the next shift group (static shifts).
    xroll_sc[...] = _roll_fwd(xr, grp)
    xcols_sc[...] = _roll_bwd(xc, grp)

    # ----- last group: .view(N, C*C) -> max -> sqrt -> normalize ------------
    @pl.when(g == ngrp - 1)
    def _finish():
        r = resp_sc[...]                                        # (C, C, N)
        # torch: responses.view(b, N, C*C).max(dim=1).  In flat row-major
        # order (c, j, m) the group of an element is flat_index mod C*C.
        if n % c2 == 0:
            # group id == m mod C*C for every (c, j): reduce channels first.
            m = jnp.max(jnp.max(r, axis=0), axis=0, keepdims=True)   # (1, N)
            best = m[:, 0:c2]
            for q in range(1, n // c2):
                best = jnp.maximum(best, m[:, q * c2:(q + 1) * c2])
        else:
            # General N: walk the flat array in chunks of C*C (all static).
            best = None
            for q in range(n):
                start = q * c2
                pieces = []
                taken = 0
                while taken < c2:
                    flat = start + taken
                    row, col = flat // n, flat % n
                    length = min(c2 - taken, n - col)
                    co_i, j_i = row // cout, row % cout
                    pieces.append(r[co_i, j_i:j_i + 1, col:col + length])
                    taken += length
                chunk = (pieces[0] if len(pieces) == 1
                         else jnp.concatenate(pieces, axis=1))
                best = chunk if best is None else jnp.maximum(best, chunk)
        c_ij = jnp.sqrt(best)                                   # (1, C*C)
        norm = jnp.sum(c_ij * c_ij, axis=1, keepdims=True) + EPS
        o_ref[0] = c_ij * pl.reciprocal(norm, approx=True)


# ---------------------------------------------------------------------------
# Wrapper
# ---------------------------------------------------------------------------
@jax.jit
def cooc_layer(x_nchw, w1):
    """x_nchw: [B, Cin, H, W]; w1: [Cout, Cin] (squeezed 1x1 conv weight)."""
    B, Cin, H, W = x_nchw.shape
    Cout = w1.shape[0]
    hout, wout = H - 2, W - 2
    N = hout * wout
    C2 = Cout * Cout
    G = _pick_group(N)               # shifts streamed per grid step
    NG = N // G

    kern = functools.partial(
        _cooc_kernel, gauss=_gaussian_3x3(), cin=Cin, cout=Cout,
        hout=hout, wout=wout, n=N, grp=G, ngrp=NG)

    out = pl.pallas_call(
        kern,
        out_shape=jax.ShapeDtypeStruct((B, 1, C2), jnp.float32),
        grid=(B, NG),
        in_specs=[
            pl.BlockSpec((1, Cin, H, W), lambda b, s: (b, 0, 0, 0)),
            pl.BlockSpec(memory_space=pltpu.MemorySpace.SMEM),   # weight table
        ],
        out_specs=pl.BlockSpec((1, 1, C2), lambda b, s: (b, 0, 0)),
        scratch_shapes=[
            pltpu.VMEM((Cout, N), jnp.float32),       # roll_{+p0}(xf)
            pltpu.VMEM((Cout, N), jnp.float32),       # roll_{-p0}(xf)
            pltpu.VMEM((Cout, Cout, N), jnp.float32),  # co-occurrence acc
        ],
        compiler_params=pltpu.CompilerParams(
            dimension_semantics=("parallel", "arbitrary")),
    )(x_nchw, w1)
    return out.reshape(B, C2)


# ---------------- Pure-JAX reference (mirrors the torch forward) ------------
def reference(x_nchw, w1):
    G = _gaussian_3x3()
    B, Cin, H, W = x_nchw.shape
    Cout = w1.shape[0]
    y1 = jnp.maximum(jnp.einsum("bihw,oi->bohw", x_nchw, w1), 0.0)
    h, w = H - 2, W - 2
    y2 = jnp.zeros((B, Cout, h, w), jnp.float32)
    for ki in range(3):
        for kj in range(3):
            y2 = y2 + G[ki][kj] * y1[:, :, ki:ki + h, kj:kj + w]
    N = h * w
    xf = y2.reshape(B, Cout, N)
    xshift = jnp.concatenate(
        [jnp.roll(xf, i, axis=2) for i in range(N)], axis=1
    ).reshape(B, N, Cout * N)
    resp = jnp.einsum("bcn,bnm->bcm", xf, xshift).reshape(B, N, Cout * Cout)
    c_ij = jnp.sqrt(jnp.max(resp, axis=1))
    norm = jnp.sum(c_ij ** 2, axis=1, keepdims=True) + EPS
    return c_ij / norm


if __name__ == "__main__":
    B, Cin, Cout, H, W = 2, 4, 4, 10, 10

    key = jax.random.PRNGKey(0)
    kx, kw = jax.random.split(key)
    x = jax.random.normal(kx, (B, Cin, H, W), dtype=jnp.float32)
    # deterministic stand-in for nn.Conv2d default init
    bound = 1.0 / math.sqrt(Cin)
    w1 = jax.random.uniform(kw, (Cout, Cin), minval=-bound, maxval=bound,
                            dtype=jnp.float32)

    out = cooc_layer(x, w1)
    out = jax.block_until_ready(out)

    ref = reference(x, w1)
    if not np.allclose(np.asarray(out), np.asarray(ref), rtol=2e-2, atol=2e-4):
        raise AssertionError(
            f"mismatch vs reference, max abs diff = "
            f"{np.max(np.abs(np.asarray(out) - np.asarray(ref)))}"
        )
    print("KERNEL_OK")
</pallas_src>

<mosaic_0001>
module attributes {stable_mosaic.version = 11 : i64} {
  func.func @_cooc_kernel(%arg0: i32, %arg1: i32, %arg2: memref<1x4x10x10xf32, #tpu.memory_space<vmem>>, %arg3: memref<4x4xf32, #tpu.memory_space<smem>>, %arg4: memref<1x1x16xf32, #tpu.memory_space<vmem>>, %arg5: memref<4x64xf32, #tpu.memory_space<vmem>>, %arg6: memref<4x64xf32, #tpu.memory_space<vmem>>, %arg7: memref<4x4x64xf32, #tpu.memory_space<vmem>>) attributes {dimension_semantics = [#tpu.dimension_semantics<parallel>, #tpu.dimension_semantics<arbitrary>], iteration_bounds = array<i64: 2, 4>, scalar_prefetch = 0 : i64, scratch_operands = 3 : i64, tpu.core_type = #tpu.core_type<tc>, window_params = [{transform_indices = @transform_0, window_bounds = array<i64: 1, 4, 10, 10>}, {transform_indices = @transform_1, window_bounds = array<i64: 4, 4>}, {transform_indices = @transform_2, window_bounds = array<i64: 1, 1, 16>}]} {
    %c0_i32 = arith.constant 0 : i32
    %0 = arith.cmpi eq, %arg1, %c0_i32 : i32
    %1 = arith.extui %0 : i1 to i32
    %c0_i32_0 = arith.constant 0 : i32
    %2 = arith.cmpi ne, %1, %c0_i32_0 : i32
    scf.if %2 {
      %cst = arith.constant 0.000000e+00 : f32
      %337 = vector.broadcast %cst : f32 to vector<4x4x64xf32>
      %c0_30 = arith.constant 0 : index
      %c0_31 = arith.constant 0 : index
      %c0_32 = arith.constant 0 : index
      %338 = vector.load %arg7[%c0_30, %c0_31, %c0_32] : memref<4x4x64xf32, #tpu.memory_space<vmem>>, vector<4x4x64xf32>
      tpu.vector_store %arg7[%c0_30, %c0_31, %c0_32], %337 {strides = array<i32>} : memref<4x4x64xf32, #tpu.memory_space<vmem>>, vector<4x4x64xf32>,
      %c0_33 = arith.constant 0 : index
      %c0_34 = arith.constant 0 : index
      %c0_35 = arith.constant 0 : index
      %c0_36 = arith.constant 0 : index
      %339 = vector.load %arg2[%c0_33, %c0_34, %c0_35, %c0_36] : memref<1x4x10x10xf32, #tpu.memory_space<vmem>>, vector<1x1x10x10xf32>
      %340 = vector.shape_cast %339 : vector<1x1x10x10xf32> to vector<10x10xf32>
      %c0_37 = arith.constant 0 : index
      %c1_38 = arith.constant 1 : index
      %c0_39 = arith.constant 0 : index
      %c0_40 = arith.constant 0 : index
      %341 = vector.load %arg2[%c0_37, %c1_38, %c0_39, %c0_40] : memref<1x4x10x10xf32, #tpu.memory_space<vmem>>, vector<1x1x10x10xf32>
      %342 = vector.shape_cast %341 : vector<1x1x10x10xf32> to vector<10x10xf32>
      %c0_41 = arith.constant 0 : index
      %c2_42 = arith.constant 2 : index
      %c0_43 = arith.constant 0 : index
      %c0_44 = arith.constant 0 : index
      %343 = vector.load %arg2[%c0_41, %c2_42, %c0_43, %c0_44] : memref<1x4x10x10xf32, #tpu.memory_space<vmem>>, vector<1x1x10x10xf32>
      %344 = vector.shape_cast %343 : vector<1x1x10x10xf32> to vector<10x10xf32>
      %c0_45 = arith.constant 0 : index
      %c3_46 = arith.constant 3 : index
      %c0_47 = arith.constant 0 : index
      %c0_48 = arith.constant 0 : index
      %345 = vector.load %arg2[%c0_45, %c3_46, %c0_47, %c0_48] : memref<1x4x10x10xf32, #tpu.memory_space<vmem>>, vector<1x1x10x10xf32>
      %346 = vector.shape_cast %345 : vector<1x1x10x10xf32> to vector<10x10xf32>
      %c0_49 = arith.constant 0 : index
      %c0_50 = arith.constant 0 : index
      %347 = memref.load %arg3[%c0_49, %c0_50] : memref<4x4xf32, #tpu.memory_space<smem>>
      %348 = vector.broadcast %347 : f32 to vector<10x10xf32>
      %349 = arith.mulf %348, %340 : vector<10x10xf32>
      %c0_51 = arith.constant 0 : index
      %c1_52 = arith.constant 1 : index
      %350 = memref.load %arg3[%c0_51, %c1_52] : memref<4x4xf32, #tpu.memory_space<smem>>
      %351 = vector.broadcast %350 : f32 to vector<10x10xf32>
      %352 = arith.mulf %351, %342 : vector<10x10xf32>
      %353 = arith.addf %349, %352 : vector<10x10xf32>
      %c0_53 = arith.constant 0 : index
      %c2_54 = arith.constant 2 : index
      %354 = memref.load %arg3[%c0_53, %c2_54] : memref<4x4xf32, #tpu.memory_space<smem>>
      %355 = vector.broadcast %354 : f32 to vector<10x10xf32>
      %356 = arith.mulf %355, %344 : vector<10x10xf32>
      %357 = arith.addf %353, %356 : vector<10x10xf32>
      %c0_55 = arith.constant 0 : index
      %c3_56 = arith.constant 3 : index
      %358 = memref.load %arg3[%c0_55, %c3_56] : memref<4x4xf32, #tpu.memory_space<smem>>
      %359 = vector.broadcast %358 : f32 to vector<10x10xf32>
      %360 = arith.mulf %359, %346 : vector<10x10xf32>
      %361 = arith.addf %357, %360 : vector<10x10xf32>
      %cst_57 = arith.constant 0.000000e+00 : f32
      %362 = vector.broadcast %cst_57 : f32 to vector<10x10xf32>
      %363 = arith.maximumf %361, %362 : vector<10x10xf32>
      %364 = vector.extract_strided_slice %363 {offsets = [0, 0], sizes = [8, 8], strides = [1, 1]} : vector<10x10xf32> to vector<8x8xf32>
      %cst_58 = arith.constant 0.0116600981 : f32
      %365 = vector.broadcast %cst_58 : f32 to vector<8x8xf32>
      %366 = arith.mulf %365, %364 : vector<8x8xf32>
      %367 = vector.extract_strided_slice %363 {offsets = [0, 1], sizes = [8, 8], strides = [1, 1]} : vector<10x10xf32> to vector<8x8xf32>
      %cst_59 = arith.constant 0.0861571207 : f32
      %368 = vector.broadcast %cst_59 : f32 to vector<8x8xf32>
      %369 = arith.mulf %368, %367 : vector<8x8xf32>
      %370 = arith.addf %366, %369 : vector<8x8xf32>
      %371 = vector.extract_strided_slice %363 {offsets = [0, 2], sizes = [8, 8], strides = [1, 1]} : vector<10x10xf32> to vector<8x8xf32>
      %cst_60 = arith.constant 0.0116600981 : f32
      %372 = vector.broadcast %cst_60 : f32 to vector<8x8xf32>
      %373 = arith.mulf %372, %371 : vector<8x8xf32>
      %374 = arith.addf %370, %373 : vector<8x8xf32>
      %375 = vector.extract_strided_slice %363 {offsets = [1, 0], sizes = [8, 8], strides = [1, 1]} : vector<10x10xf32> to vector<8x8xf32>
      %cst_61 = arith.constant 0.0861571207 : f32
      %376 = vector.broadcast %cst_61 : f32 to vector<8x8xf32>
      %377 = arith.mulf %376, %375 : vector<8x8xf32>
      %378 = arith.addf %374, %377 : vector<8x8xf32>
      %379 = vector.extract_strided_slice %363 {offsets = [1, 1], sizes = [8, 8], strides = [1, 1]} : vector<10x10xf32> to vector<8x8xf32>
      %cst_62 = arith.constant 0.636619746 : f32
      %380 = vector.broadcast %cst_62 : f32 to vector<8x8xf32>
      %381 = arith.mulf %380, %379 : vector<8x8xf32>
      %382 = arith.addf %378, %381 : vector<8x8xf32>
      %383 = vector.extract_strided_slice %363 {offsets = [1, 2], sizes = [8, 8], strides = [1, 1]} : vector<10x10xf32> to vector<8x8xf32>
      %cst_63 = arith.constant 0.0861571207 : f32
      %384 = vector.broadcast %cst_63 : f32 to vector<8x8xf32>
      %385 = arith.mulf %384, %383 : vector<8x8xf32>
      %386 = arith.addf %382, %385 : vector<8x8xf32>
      %387 = vector.extract_strided_slice %363 {offsets = [2, 0], sizes = [8, 8], strides = [1, 1]} : vector<10x10xf32> to vector<8x8xf32>
      %cst_64 = arith.constant 0.0116600981 : f32
      %388 = vector.broadcast %cst_64 : f32 to vector<8x8xf32>
      %389 = arith.mulf %388, %387 : vector<8x8xf32>
      %390 = arith.addf %386, %389 : vector<8x8xf32>
      %391 = vector.extract_strided_slice %363 {offsets = [2, 1], sizes = [8, 8], strides = [1, 1]} : vector<10x10xf32> to vector<8x8xf32>
      %cst_65 = arith.constant 0.0861571207 : f32
      %392 = vector.broadcast %cst_65 : f32 to vector<8x8xf32>
      %393 = arith.mulf %392, %391 : vector<8x8xf32>
      %394 = arith.addf %390, %393 : vector<8x8xf32>
      %395 = vector.extract_strided_slice %363 {offsets = [2, 2], sizes = [8, 8], strides = [1, 1]} : vector<10x10xf32> to vector<8x8xf32>
      %cst_66 = arith.constant 0.0116600981 : f32
      %396 = vector.broadcast %cst_66 : f32 to vector<8x8xf32>
      %397 = arith.mulf %396, %395 : vector<8x8xf32>
      %398 = arith.addf %394, %397 : vector<8x8xf32>
      %399 = vector.extract_strided_slice %398 {offsets = [0, 0], sizes = [1, 8], strides = [1, 1]} : vector<8x8xf32> to vector<1x8xf32>
      %c0_67 = arith.constant 0 : index
      %c0_68 = arith.constant 0 : index
      %400 = vector.load %arg5[%c0_67, %c0_68] : memref<4x64xf32, #tpu.memory_space<vmem>>, vector<1x8xf32>
      tpu.vector_store %arg5[%c0_67, %c0_68], %399 {strides = array<i32>} : memref<4x64xf32, #tpu.memory_space<vmem>>, vector<1x8xf32>,
      %401 = vector.extract_strided_slice %398 {offsets = [1, 0], sizes = [1, 8], strides = [1, 1]} : vector<8x8xf32> to vector<1x8xf32>
      %c0_69 = arith.constant 0 : index
      %c8 = arith.constant 8 : index
      %402 = vector.load %arg5[%c0_69, %c8] : memref<4x64xf32, #tpu.memory_space<vmem>>, vector<1x8xf32>
      tpu.vector_store %arg5[%c0_69, %c8], %401 {strides = array<i32>} : memref<4x64xf32, #tpu.memory_space<vmem>>, vector<1x8xf32>,
      %403 = vector.extract_strided_slice %398 {offsets = [2, 0], sizes = [1, 8], strides = [1, 1]} : vector<8x8xf32> to vector<1x8xf32>
      %c0_70 = arith.constant 0 : index
      %c16 = arith.constant 16 : index
      %404 = vector.load %arg5[%c0_70, %c16] : memref<4x64xf32, #tpu.memory_space<vmem>>, vector<1x8xf32>
      tpu.vector_store %arg5[%c0_70, %c16], %403 {strides = array<i32>} : memref<4x64xf32, #tpu.memory_space<vmem>>, vector<1x8xf32>,
      %405 = vector.extract_strided_slice %398 {offsets = [3, 0], sizes = [1, 8], strides = [1, 1]} : vector<8x8xf32> to vector<1x8xf32>
      %c0_71 = arith.constant 0 : index
      %c24 = arith.constant 24 : index
      %406 = vector.load %arg5[%c0_71, %c24] : memref<4x64xf32, #tpu.memory_space<vmem>>, vector<1x8xf32>
      tpu.vector_store %arg5[%c0_71, %c24], %405 {strides = array<i32>} : memref<4x64xf32, #tpu.memory_space<vmem>>, vector<1x8xf32>,
      %407 = vector.extract_strided_slice %398 {offsets = [4, 0], sizes = [1, 8], strides = [1, 1]} : vector<8x8xf32> to vector<1x8xf32>
      %c0_72 = arith.constant 0 : index
      %c32 = arith.constant 32 : index
      %408 = vector.load %arg5[%c0_72, %c32] : memref<4x64xf32, #tpu.memory_space<vmem>>, vector<1x8xf32>
      tpu.vector_store %arg5[%c0_72, %c32], %407 {strides = array<i32>} : memref<4x64xf32, #tpu.memory_space<vmem>>, vector<1x8xf32>,
      %409 = vector.extract_strided_slice %398 {offsets = [5, 0], sizes = [1, 8], strides = [1, 1]} : vector<8x8xf32> to vector<1x8xf32>
      %c0_73 = arith.constant 0 : index
      %c40 = arith.constant 40 : index
      %410 = vector.load %arg5[%c0_73, %c40] : memref<4x64xf32, #tpu.memory_space<vmem>>, vector<1x8xf32>
      tpu.vector_store %arg5[%c0_73, %c40], %409 {strides = array<i32>} : memref<4x64xf32, #tpu.memory_space<vmem>>, vector<1x8xf32>,
      %411 = vector.extract_strided_slice %398 {offsets = [6, 0], sizes = [1, 8], strides = [1, 1]} : vector<8x8xf32> to vector<1x8xf32>
      %c0_74 = arith.constant 0 : index
      %c48 = arith.constant 48 : index
      %412 = vector.load %arg5[%c0_74, %c48] : memref<4x64xf32, #tpu.memory_space<vmem>>, vector<1x8xf32>
      tpu.vector_store %arg5[%c0_74, %c48], %411 {strides = array<i32>} : memref<4x64xf32, #tpu.memory_space<vmem>>, vector<1x8xf32>,
      %413 = vector.extract_strided_slice %398 {offsets = [7, 0], sizes = [1, 8], strides = [1, 1]} : vector<8x8xf32> to vector<1x8xf32>
      %c0_75 = arith.constant 0 : index
      %c56 = arith.constant 56 : index
      %414 = vector.load %arg5[%c0_75, %c56] : memref<4x64xf32, #tpu.memory_space<vmem>>, vector<1x8xf32>
      tpu.vector_store %arg5[%c0_75, %c56], %413 {strides = array<i32>} : memref<4x64xf32, #tpu.memory_space<vmem>>, vector<1x8xf32>,
      %c1_76 = arith.constant 1 : index
      %c0_77 = arith.constant 0 : index
      %415 = memref.load %arg3[%c1_76, %c0_77] : memref<4x4xf32, #tpu.memory_space<smem>>
      %416 = vector.broadcast %415 : f32 to vector<10x10xf32>
      %417 = arith.mulf %416, %340 : vector<10x10xf32>
      %c1_78 = arith.constant 1 : index
      %c1_79 = arith.constant 1 : index
      %418 = memref.load %arg3[%c1_78, %c1_79] : memref<4x4xf32, #tpu.memory_space<smem>>
      %419 = vector.broadcast %418 : f32 to vector<10x10xf32>
      %420 = arith.mulf %419, %342 : vector<10x10xf32>
      %421 = arith.addf %417, %420 : vector<10x10xf32>
      %c1_80 = arith.constant 1 : index
      %c2_81 = arith.constant 2 : index
      %422 = memref.load %arg3[%c1_80, %c2_81] : memref<4x4xf32, #tpu.memory_space<smem>>
      %423 = vector.broadcast %422 : f32 to vector<10x10xf32>
      %424 = arith.mulf %423, %344 : vector<10x10xf32>
      %425 = arith.addf %421, %424 : vector<10x10xf32>
      %c1_82 = arith.constant 1 : index
      %c3_83 = arith.constant 3 : index
      %426 = memref.load %arg3[%c1_82, %c3_83] : memref<4x4xf32, #tpu.memory_space<smem>>
      %427 = vector.broadcast %426 : f32 to vector<10x10xf32>
      %428 = arith.mulf %427, %346 : vector<10x10xf32>
      %429 = arith.addf %425, %428 : vector<10x10xf32>
      %cst_84 = arith.constant 0.000000e+00 : f32
      %430 = vector.broadcast %cst_84 : f32 to vector<10x10xf32>
      %431 = arith.maximumf %429, %430 : vector<10x10xf32>
      %432 = vector.extract_strided_slice %431 {offsets = [0, 0], sizes = [8, 8], strides = [1, 1]} : vector<10x10xf32> to vector<8x8xf32>
      %cst_85 = arith.constant 0.0116600981 : f32
      %433 = vector.broadcast %cst_85 : f32 to vector<8x8xf32>
      %434 = arith.mulf %433, %432 : vector<8x8xf32>
      %435 = vector.extract_strided_slice %431 {offsets = [0, 1], sizes = [8, 8], strides = [1, 1]} : vector<10x10xf32> to vector<8x8xf32>
      %cst_86 = arith.constant 0.0861571207 : f32
      %436 = vector.broadcast %cst_86 : f32 to vector<8x8xf32>
      %437 = arith.mulf %436, %435 : vector<8x8xf32>
      %438 = arith.addf %434, %437 : vector<8x8xf32>
      %439 = vector.extract_strided_slice %431 {offsets = [0, 2], sizes = [8, 8], strides = [1, 1]} : vector<10x10xf32> to vector<8x8xf32>
      %cst_87 = arith.constant 0.0116600981 : f32
      %440 = vector.broadcast %cst_87 : f32 to vector<8x8xf32>
      %441 = arith.mulf %440, %439 : vector<8x8xf32>
      %442 = arith.addf %438, %441 : vector<8x8xf32>
      %443 = vector.extract_strided_slice %431 {offsets = [1, 0], sizes = [8, 8], strides = [1, 1]} : vector<10x10xf32> to vector<8x8xf32>
      %cst_88 = arith.constant 0.0861571207 : f32
      %444 = vector.broadcast %cst_88 : f32 to vector<8x8xf32>
      %445 = arith.mulf %444, %443 : vector<8x8xf32>
      %446 = arith.addf %442, %445 : vector<8x8xf32>
      %447 = vector.extract_strided_slice %431 {offsets = [1, 1], sizes = [8, 8], strides = [1, 1]} : vector<10x10xf32> to vector<8x8xf32>
      %cst_89 = arith.constant 0.636619746 : f32
      %448 = vector.broadcast %cst_89 : f32 to vector<8x8xf32>
      %449 = arith.mulf %448, %447 : vector<8x8xf32>
      %450 = arith.addf %446, %449 : vector<8x8xf32>
      %451 = vector.extract_strided_slice %431 {offsets = [1, 2], sizes = [8, 8], strides = [1, 1]} : vector<10x10xf32> to vector<8x8xf32>
      %cst_90 = arith.constant 0.0861571207 : f32
      %452 = vector.broadcast %cst_90 : f32 to vector<8x8xf32>
      %453 = arith.mulf %452, %451 : vector<8x8xf32>
      %454 = arith.addf %450, %453 : vector<8x8xf32>
      %455 = vector.extract_strided_slice %431 {offsets = [2, 0], sizes = [8, 8], strides = [1, 1]} : vector<10x10xf32> to vector<8x8xf32>
      %cst_91 = arith.constant 0.0116600981 : f32
      %456 = vector.broadcast %cst_91 : f32 to vector<8x8xf32>
      %457 = arith.mulf %456, %455 : vector<8x8xf32>
      %458 = arith.addf %454, %457 : vector<8x8xf32>
      %459 = vector.extract_strided_slice %431 {offsets = [2, 1], sizes = [8, 8], strides = [1, 1]} : vector<10x10xf32> to vector<8x8xf32>
      %cst_92 = arith.constant 0.0861571207 : f32
      %460 = vector.broadcast %cst_92 : f32 to vector<8x8xf32>
      %461 = arith.mulf %460, %459 : vector<8x8xf32>
      %462 = arith.addf %458, %461 : vector<8x8xf32>
      %463 = vector.extract_strided_slice %431 {offsets = [2, 2], sizes = [8, 8], strides = [1, 1]} : vector<10x10xf32> to vector<8x8xf32>
      %cst_93 = arith.constant 0.0116600981 : f32
      %464 = vector.broadcast %cst_93 : f32 to vector<8x8xf32>
      %465 = arith.mulf %464, %463 : vector<8x8xf32>
      %466 = arith.addf %462, %465 : vector<8x8xf32>
      %467 = vector.extract_strided_slice %466 {offsets = [0, 0], sizes = [1, 8], strides = [1, 1]} : vector<8x8xf32> to vector<1x8xf32>
      %c1_94 = arith.constant 1 : index
      %c0_95 = arith.constant 0 : index
      %468 = vector.load %arg5[%c1_94, %c0_95] : memref<4x64xf32, #tpu.memory_space<vmem>>, vector<1x8xf32>
      tpu.vector_store %arg5[%c1_94, %c0_95], %467 {strides = array<i32>} : memref<4x64xf32, #tpu.memory_space<vmem>>, vector<1x8xf32>,
      %469 = vector.extract_strided_slice %466 {offsets = [1, 0], sizes = [1, 8], strides = [1, 1]} : vector<8x8xf32> to vector<1x8xf32>
      %c1_96 = arith.constant 1 : index
      %c8_97 = arith.constant 8 : index
      %470 = vector.load %arg5[%c1_96, %c8_97] : memref<4x64xf32, #tpu.memory_space<vmem>>, vector<1x8xf32>
      tpu.vector_store %arg5[%c1_96, %c8_97], %469 {strides = array<i32>} : memref<4x64xf32, #tpu.memory_space<vmem>>, vector<1x8xf32>,
      %471 = vector.extract_strided_slice %466 {offsets = [2, 0], sizes = [1, 8], strides = [1, 1]} : vector<8x8xf32> to vector<1x8xf32>
      %c1_98 = arith.constant 1 : index
      %c16_99 = arith.constant 16 : index
      %472 = vector.load %arg5[%c1_98, %c16_99] : memref<4x64xf32, #tpu.memory_space<vmem>>, vector<1x8xf32>
      tpu.vector_store %arg5[%c1_98, %c16_99], %471 {strides = array<i32>} : memref<4x64xf32, #tpu.memory_space<vmem>>, vector<1x8xf32>,
      %473 = vector.extract_strided_slice %466 {offsets = [3, 0], sizes = [1, 8], strides = [1, 1]} : vector<8x8xf32> to vector<1x8xf32>
      %c1_100 = arith.constant 1 : index
      %c24_101 = arith.constant 24 : index
      %474 = vector.load %arg5[%c1_100, %c24_101] : memref<4x64xf32, #tpu.memory_space<vmem>>, vector<1x8xf32>
      tpu.vector_store %arg5[%c1_100, %c24_101], %473 {strides = array<i32>} : memref<4x64xf32, #tpu.memory_space<vmem>>, vector<1x8xf32>,
      %475 = vector.extract_strided_slice %466 {offsets = [4, 0], sizes = [1, 8], strides = [1, 1]} : vector<8x8xf32> to vector<1x8xf32>
      %c1_102 = arith.constant 1 : index
      %c32_103 = arith.constant 32 : index
      %476 = vector.load %arg5[%c1_102, %c32_103] : memref<4x64xf32, #tpu.memory_space<vmem>>, vector<1x8xf32>
      tpu.vector_store %arg5[%c1_102, %c32_103], %475 {strides = array<i32>} : memref<4x64xf32, #tpu.memory_space<vmem>>, vector<1x8xf32>,
      %477 = vector.extract_strided_slice %466 {offsets = [5, 0], sizes = [1, 8], strides = [1, 1]} : vector<8x8xf32> to vector<1x8xf32>
      %c1_104 = arith.constant 1 : index
      %c40_105 = arith.constant 40 : index
      %478 = vector.load %arg5[%c1_104, %c40_105] : memref<4x64xf32, #tpu.memory_space<vmem>>, vector<1x8xf32>
      tpu.vector_store %arg5[%c1_104, %c40_105], %477 {strides = array<i32>} : memref<4x64xf32, #tpu.memory_space<vmem>>, vector<1x8xf32>,
      %479 = vector.extract_strided_slice %466 {offsets = [6, 0], sizes = [1, 8], strides = [1, 1]} : vector<8x8xf32> to vector<1x8xf32>
      %c1_106 = arith.constant 1 : index
      %c48_107 = arith.constant 48 : index
      %480 = vector.load %arg5[%c1_106, %c48_107] : memref<4x64xf32, #tpu.memory_space<vmem>>, vector<1x8xf32>
      tpu.vector_store %arg5[%c1_106, %c48_107], %479 {strides = array<i32>} : memref<4x64xf32, #tpu.memory_space<vmem>>, vector<1x8xf32>,
      %481 = vector.extract_strided_slice %466 {offsets = [7, 0], sizes = [1, 8], strides = [1, 1]} : vector<8x8xf32> to vector<1x8xf32>
      %c1_108 = arith.constant 1 : index
      %c56_109 = arith.constant 56 : index
      %482 = vector.load %arg5[%c1_108, %c56_109] : memref<4x64xf32, #tpu.memory_space<vmem>>, vector<1x8xf32>
      tpu.vector_store %arg5[%c1_108, %c56_109], %481 {strides = array<i32>} : memref<4x64xf32, #tpu.memory_space<vmem>>, vector<1x8xf32>,
      %c2_110 = arith.constant 2 : index
      %c0_111 = arith.constant 0 : index
      %483 = memref.load %arg3[%c2_110, %c0_111] : memref<4x4xf32, #tpu.memory_space<smem>>
      %484 = vector.broadcast %483 : f32 to vector<10x10xf32>
      %485 = arith.mulf %484, %340 : vector<10x10xf32>
      %c2_112 = arith.constant 2 : index
      %c1_113 = arith.constant 1 : index
      %486 = memref.load %arg3[%c2_112, %c1_113] : memref<4x4xf32, #tpu.memory_space<smem>>
      %487 = vector.broadcast %486 : f32 to vector<10x10xf32>
      %488 = arith.mulf %487, %342 : vector<10x10xf32>
      %489 = arith.addf %485, %488 : vector<10x10xf32>
      %c2_114 = arith.constant 2 : index
      %c2_115 = arith.constant 2 : index
      %490 = memref.load %arg3[%c2_114, %c2_115] : memref<4x4xf32, #tpu.memory_space<smem>>
      %491 = vector.broadcast %490 : f32 to vector<10x10xf32>
      %492 = arith.mulf %491, %344 : vector<10x10xf32>
      %493 = arith.addf %489, %492 : vector<10x10xf32>
      %c2_116 = arith.constant 2 : index
      %c3_117 = arith.constant 3 : index
      %494 = memref.load %arg3[%c2_116, %c3_117] : memref<4x4xf32, #tpu.memory_space<smem>>
      %495 = vector.broadcast %494 : f32 to vector<10x10xf32>
      %496 = arith.mulf %495, %346 : vector<10x10xf32>
      %497 = arith.addf %493, %496 : vector<10x10xf32>
      %cst_118 = arith.constant 0.000000e+00 : f32
      %498 = vector.broadcast %cst_118 : f32 to vector<10x10xf32>
      %499 = arith.maximumf %497, %498 : vector<10x10xf32>
      %500 = vector.extract_strided_slice %499 {offsets = [0, 0], sizes = [8, 8], strides = [1, 1]} : vector<10x10xf32> to vector<8x8xf32>
      %cst_119 = arith.constant 0.0116600981 : f32
      %501 = vector.broadcast %cst_119 : f32 to vector<8x8xf32>
      %502 = arith.mulf %501, %500 : vector<8x8xf32>
      %503 = vector.extract_strided_slice %499 {offsets = [0, 1], sizes = [8, 8], strides = [1, 1]} : vector<10x10xf32> to vector<8x8xf32>
      %cst_120 = arith.constant 0.0861571207 : f32
      %504 = vector.broadcast %cst_120 : f32 to vector<8x8xf32>
      %505 = arith.mulf %504, %503 : vector<8x8xf32>
      %506 = arith.addf %502, %505 : vector<8x8xf32>
      %507 = vector.extract_strided_slice %499 {offsets = [0, 2], sizes = [8, 8], strides = [1, 1]} : vector<10x10xf32> to vector<8x8xf32>
      %cst_121 = arith.constant 0.0116600981 : f32
      %508 = vector.broadcast %cst_121 : f32 to vector<8x8xf32>
      %509 = arith.mulf %508, %507 : vector<8x8xf32>
      %510 = arith.addf %506, %509 : vector<8x8xf32>
      %511 = vector.extract_strided_slice %499 {offsets = [1, 0], sizes = [8, 8], strides = [1, 1]} : vector<10x10xf32> to vector<8x8xf32>
      %cst_122 = arith.constant 0.0861571207 : f32
      %512 = vector.broadcast %cst_122 : f32 to vector<8x8xf32>
      %513 = arith.mulf %512, %511 : vector<8x8xf32>
      %514 = arith.addf %510, %513 : vector<8x8xf32>
      %515 = vector.extract_strided_slice %499 {offsets = [1, 1], sizes = [8, 8], strides = [1, 1]} : vector<10x10xf32> to vector<8x8xf32>
      %cst_123 = arith.constant 0.636619746 : f32
      %516 = vector.broadcast %cst_123 : f32 to vector<8x8xf32>
      %517 = arith.mulf %516, %515 : vector<8x8xf32>
      %518 = arith.addf %514, %517 : vector<8x8xf32>
      %519 = vector.extract_strided_slice %499 {offsets = [1, 2], sizes = [8, 8], strides = [1, 1]} : vector<10x10xf32> to vector<8x8xf32>
      %cst_124 = arith.constant 0.0861571207 : f32
      %520 = vector.broadcast %cst_124 : f32 to vector<8x8xf32>
      %521 = arith.mulf %520, %519 : vector<8x8xf32>
      %522 = arith.addf %518, %521 : vector<8x8xf32>
      %523 = vector.extract_strided_slice %499 {offsets = [2, 0], sizes = [8, 8], strides = [1, 1]} : vector<10x10xf32> to vector<8x8xf32>
      %cst_125 = arith.constant 0.0116600981 : f32
      %524 = vector.broadcast %cst_125 : f32 to vector<8x8xf32>
      %525 = arith.mulf %524, %523 : vector<8x8xf32>
      %526 = arith.addf %522, %525 : vector<8x8xf32>
      %527 = vector.extract_strided_slice %499 {offsets = [2, 1], sizes = [8, 8], strides = [1, 1]} : vector<10x10xf32> to vector<8x8xf32>
      %cst_126 = arith.constant 0.0861571207 : f32
      %528 = vector.broadcast %cst_126 : f32 to vector<8x8xf32>
      %529 = arith.mulf %528, %527 : vector<8x8xf32>
      %530 = arith.addf %526, %529 : vector<8x8xf32>
      %531 = vector.extract_strided_slice %499 {offsets = [2, 2], sizes = [8, 8], strides = [1, 1]} : vector<10x10xf32> to vector<8x8xf32>
      %cst_127 = arith.constant 0.0116600981 : f32
      %532 = vector.broadcast %cst_127 : f32 to vector<8x8xf32>
      %533 = arith.mulf %532, %531 : vector<8x8xf32>
      %534 = arith.addf %530, %533 : vector<8x8xf32>
      %535 = vector.extract_strided_slice %534 {offsets = [0, 0], sizes = [1, 8], strides = [1, 1]} : vector<8x8xf32> to vector<1x8xf32>
      %c2_128 = arith.constant 2 : index
      %c0_129 = arith.constant 0 : index
      %536 = vector.load %arg5[%c2_128, %c0_129] : memref<4x64xf32, #tpu.memory_space<vmem>>, vector<1x8xf32>
      tpu.vector_store %arg5[%c2_128, %c0_129], %535 {strides = array<i32>} : memref<4x64xf32, #tpu.memory_space<vmem>>, vector<1x8xf32>,
      %537 = vector.extract_strided_slice %534 {offsets = [1, 0], sizes = [1, 8], strides = [1, 1]} : vector<8x8xf32> to vector<1x8xf32>
      %c2_130 = arith.constant 2 : index
      %c8_131 = arith.constant 8 : index
      %538 = vector.load %arg5[%c2_130, %c8_131] : memref<4x64xf32, #tpu.memory_space<vmem>>, vector<1x8xf32>
      tpu.vector_store %arg5[%c2_130, %c8_131], %537 {strides = array<i32>} : memref<4x64xf32, #tpu.memory_space<vmem>>, vector<1x8xf32>,
      %539 = vector.extract_strided_slice %534 {offsets = [2, 0], sizes = [1, 8], strides = [1, 1]} : vector<8x8xf32> to vector<1x8xf32>
      %c2_132 = arith.constant 2 : index
      %c16_133 = arith.constant 16 : index
      %540 = vector.load %arg5[%c2_132, %c16_133] : memref<4x64xf32, #tpu.memory_space<vmem>>, vector<1x8xf32>
      tpu.vector_store %arg5[%c2_132, %c16_133], %539 {strides = array<i32>} : memref<4x64xf32, #tpu.memory_space<vmem>>, vector<1x8xf32>,
      %541 = vector.extract_strided_slice %534 {offsets = [3, 0], sizes = [1, 8], strides = [1, 1]} : vector<8x8xf32> to vector<1x8xf32>
      %c2_134 = arith.constant 2 : index
      %c24_135 = arith.constant 24 : index
      %542 = vector.load %arg5[%c2_134, %c24_135] : memref<4x64xf32, #tpu.memory_space<vmem>>, vector<1x8xf32>
      tpu.vector_store %arg5[%c2_134, %c24_135], %541 {strides = array<i32>} : memref<4x64xf32, #tpu.memory_space<vmem>>, vector<1x8xf32>,
      %543 = vector.extract_strided_slice %534 {offsets = [4, 0], sizes = [1, 8], strides = [1, 1]} : vector<8x8xf32> to vector<1x8xf32>
      %c2_136 = arith.constant 2 : index
      %c32_137 = arith.constant 32 : index
      %544 = vector.load %arg5[%c2_136, %c32_137] : memref<4x64xf32, #tpu.memory_space<vmem>>, vector<1x8xf32>
      tpu.vector_store %arg5[%c2_136, %c32_137], %543 {strides = array<i32>} : memref<4x64xf32, #tpu.memory_space<vmem>>, vector<1x8xf32>,
      %545 = vector.extract_strided_slice %534 {offsets = [5, 0], sizes = [1, 8], strides = [1, 1]} : vector<8x8xf32> to vector<1x8xf32>
      %c2_138 = arith.constant 2 : index
      %c40_139 = arith.constant 40 : index
      %546 = vector.load %arg5[%c2_138, %c40_139] : memref<4x64xf32, #tpu.memory_space<vmem>>, vector<1x8xf32>
      tpu.vector_store %arg5[%c2_138, %c40_139], %545 {strides = array<i32>} : memref<4x64xf32, #tpu.memory_space<vmem>>, vector<1x8xf32>,
      %547 = vector.extract_strided_slice %534 {offsets = [6, 0], sizes = [1, 8], strides = [1, 1]} : vector<8x8xf32> to vector<1x8xf32>
      %c2_140 = arith.constant 2 : index
      %c48_141 = arith.constant 48 : index
      %548 = vector.load %arg5[%c2_140, %c48_141] : memref<4x64xf32, #tpu.memory_space<vmem>>, vector<1x8xf32>
      tpu.vector_store %arg5[%c2_140, %c48_141], %547 {strides = array<i32>} : memref<4x64xf32, #tpu.memory_space<vmem>>, vector<1x8xf32>,
      %549 = vector.extract_strided_slice %534 {offsets = [7, 0], sizes = [1, 8], strides = [1, 1]} : vector<8x8xf32> to vector<1x8xf32>
      %c2_142 = arith.constant 2 : index
      %c56_143 = arith.constant 56 : index
      %550 = vector.load %arg5[%c2_142, %c56_143] : memref<4x64xf32, #tpu.memory_space<vmem>>, vector<1x8xf32>
      tpu.vector_store %arg5[%c2_142, %c56_143], %549 {strides = array<i32>} : memref<4x64xf32, #tpu.memory_space<vmem>>, vector<1x8xf32>,
      %c3_144 = arith.constant 3 : index
      %c0_145 = arith.constant 0 : index
      %551 = memref.load %arg3[%c3_144, %c0_145] : memref<4x4xf32, #tpu.memory_space<smem>>
      %552 = vector.broadcast %551 : f32 to vector<10x10xf32>
      %553 = arith.mulf %552, %340 : vector<10x10xf32>
      %c3_146 = arith.constant 3 : index
      %c1_147 = arith.constant 1 : index
      %554 = memref.load %arg3[%c3_146, %c1_147] : memref<4x4xf32, #tpu.memory_space<smem>>
      %555 = vector.broadcast %554 : f32 to vector<10x10xf32>
      %556 = arith.mulf %555, %342 : vector<10x10xf32>
      %557 = arith.addf %553, %556 : vector<10x10xf32>
      %c3_148 = arith.constant 3 : index
      %c2_149 = arith.constant 2 : index
      %558 = memref.load %arg3[%c3_148, %c2_149] : memref<4x4xf32, #tpu.memory_space<smem>>
      %559 = vector.broadcast %558 : f32 to vector<10x10xf32>
      %560 = arith.mulf %559, %344 : vector<10x10xf32>
      %561 = arith.addf %557, %560 : vector<10x10xf32>
      %c3_150 = arith.constant 3 : index
      %c3_151 = arith.constant 3 : index
      %562 = memref.load %arg3[%c3_150, %c3_151] : memref<4x4xf32, #tpu.memory_space<smem>>
      %563 = vector.broadcast %562 : f32 to vector<10x10xf32>
      %564 = arith.mulf %563, %346 : vector<10x10xf32>
      %565 = arith.addf %561, %564 : vector<10x10xf32>
      %cst_152 = arith.constant 0.000000e+00 : f32
      %566 = vector.broadcast %cst_152 : f32 to vector<10x10xf32>
      %567 = arith.maximumf %565, %566 : vector<10x10xf32>
      %568 = vector.extract_strided_slice %567 {offsets = [0, 0], sizes = [8, 8], strides = [1, 1]} : vector<10x10xf32> to vector<8x8xf32>
      %cst_153 = arith.constant 0.0116600981 : f32
      %569 = vector.broadcast %cst_153 : f32 to vector<8x8xf32>
      %570 = arith.mulf %569, %568 : vector<8x8xf32>
      %571 = vector.extract_strided_slice %567 {offsets = [0, 1], sizes = [8, 8], strides = [1, 1]} : vector<10x10xf32> to vector<8x8xf32>
      %cst_154 = arith.constant 0.0861571207 : f32
      %572 = vector.broadcast %cst_154 : f32 to vector<8x8xf32>
      %573 = arith.mulf %572, %571 : vector<8x8xf32>
      %574 = arith.addf %570, %573 : vector<8x8xf32>
      %575 = vector.extract_strided_slice %567 {offsets = [0, 2], sizes = [8, 8], strides = [1, 1]} : vector<10x10xf32> to vector<8x8xf32>
      %cst_155 = arith.constant 0.0116600981 : f32
      %576 = vector.broadcast %cst_155 : f32 to vector<8x8xf32>
      %577 = arith.mulf %576, %575 : vector<8x8xf32>
      %578 = arith.addf %574, %577 : vector<8x8xf32>
      %579 = vector.extract_strided_slice %567 {offsets = [1, 0], sizes = [8, 8], strides = [1, 1]} : vector<10x10xf32> to vector<8x8xf32>
      %cst_156 = arith.constant 0.0861571207 : f32
      %580 = vector.broadcast %cst_156 : f32 to vector<8x8xf32>
      %581 = arith.mulf %580, %579 : vector<8x8xf32>
      %582 = arith.addf %578, %581 : vector<8x8xf32>
      %583 = vector.extract_strided_slice %567 {offsets = [1, 1], sizes = [8, 8], strides = [1, 1]} : vector<10x10xf32> to vector<8x8xf32>
      %cst_157 = arith.constant 0.636619746 : f32
      %584 = vector.broadcast %cst_157 : f32 to vector<8x8xf32>
      %585 = arith.mulf %584, %583 : vector<8x8xf32>
      %586 = arith.addf %582, %585 : vector<8x8xf32>
      %587 = vector.extract_strided_slice %567 {offsets = [1, 2], sizes = [8, 8], strides = [1, 1]} : vector<10x10xf32> to vector<8x8xf32>
      %cst_158 = arith.constant 0.0861571207 : f32
      %588 = vector.broadcast %cst_158 : f32 to vector<8x8xf32>
      %589 = arith.mulf %588, %587 : vector<8x8xf32>
      %590 = arith.addf %586, %589 : vector<8x8xf32>
      %591 = vector.extract_strided_slice %567 {offsets = [2, 0], sizes = [8, 8], strides = [1, 1]} : vector<10x10xf32> to vector<8x8xf32>
      %cst_159 = arith.constant 0.0116600981 : f32
      %592 = vector.broadcast %cst_159 : f32 to vector<8x8xf32>
      %593 = arith.mulf %592, %591 : vector<8x8xf32>
      %594 = arith.addf %590, %593 : vector<8x8xf32>
      %595 = vector.extract_strided_slice %567 {offsets = [2, 1], sizes = [8, 8], strides = [1, 1]} : vector<10x10xf32> to vector<8x8xf32>
      %cst_160 = arith.constant 0.0861571207 : f32
      %596 = vector.broadcast %cst_160 : f32 to vector<8x8xf32>
      %597 = arith.mulf %596, %595 : vector<8x8xf32>
      %598 = arith.addf %594, %597 : vector<8x8xf32>
      %599 = vector.extract_strided_slice %567 {offsets = [2, 2], sizes = [8, 8], strides = [1, 1]} : vector<10x10xf32> to vector<8x8xf32>
      %cst_161 = arith.constant 0.0116600981 : f32
      %600 = vector.broadcast %cst_161 : f32 to vector<8x8xf32>
      %601 = arith.mulf %600, %599 : vector<8x8xf32>
      %602 = arith.addf %598, %601 : vector<8x8xf32>
      %603 = vector.extract_strided_slice %602 {offsets = [0, 0], sizes = [1, 8], strides = [1, 1]} : vector<8x8xf32> to vector<1x8xf32>
      %c3_162 = arith.constant 3 : index
      %c0_163 = arith.constant 0 : index
      %604 = vector.load %arg5[%c3_162, %c0_163] : memref<4x64xf32, #tpu.memory_space<vmem>>, vector<1x8xf32>
      tpu.vector_store %arg5[%c3_162, %c0_163], %603 {strides = array<i32>} : memref<4x64xf32, #tpu.memory_space<vmem>>, vector<1x8xf32>,
      %605 = vector.extract_strided_slice %602 {offsets = [1, 0], sizes = [1, 8], strides = [1, 1]} : vector<8x8xf32> to vector<1x8xf32>
      %c3_164 = arith.constant 3 : index
      %c8_165 = arith.constant 8 : index
      %606 = vector.load %arg5[%c3_164, %c8_165] : memref<4x64xf32, #tpu.memory_space<vmem>>, vector<1x8xf32>
      tpu.vector_store %arg5[%c3_164, %c8_165], %605 {strides = array<i32>} : memref<4x64xf32, #tpu.memory_space<vmem>>, vector<1x8xf32>,
      %607 = vector.extract_strided_slice %602 {offsets = [2, 0], sizes = [1, 8], strides = [1, 1]} : vector<8x8xf32> to vector<1x8xf32>
      %c3_166 = arith.constant 3 : index
      %c16_167 = arith.constant 16 : index
      %608 = vector.load %arg5[%c3_166, %c16_167] : memref<4x64xf32, #tpu.memory_space<vmem>>, vector<1x8xf32>
      tpu.vector_store %arg5[%c3_166, %c16_167], %607 {strides = array<i32>} : memref<4x64xf32, #tpu.memory_space<vmem>>, vector<1x8xf32>,
      %609 = vector.extract_strided_slice %602 {offsets = [3, 0], sizes = [1, 8], strides = [1, 1]} : vector<8x8xf32> to vector<1x8xf32>
      %c3_168 = arith.constant 3 : index
      %c24_169 = arith.constant 24 : index
      %610 = vector.load %arg5[%c3_168, %c24_169] : memref<4x64xf32, #tpu.memory_space<vmem>>, vector<1x8xf32>
      tpu.vector_store %arg5[%c3_168, %c24_169], %609 {strides = array<i32>} : memref<4x64xf32, #tpu.memory_space<vmem>>, vector<1x8xf32>,
      %611 = vector.extract_strided_slice %602 {offsets = [4, 0], sizes = [1, 8], strides = [1, 1]} : vector<8x8xf32> to vector<1x8xf32>
      %c3_170 = arith.constant 3 : index
      %c32_171 = arith.constant 32 : index
      %612 = vector.load %arg5[%c3_170, %c32_171] : memref<4x64xf32, #tpu.memory_space<vmem>>, vector<1x8xf32>
      tpu.vector_store %arg5[%c3_170, %c32_171], %611 {strides = array<i32>} : memref<4x64xf32, #tpu.memory_space<vmem>>, vector<1x8xf32>,
      %613 = vector.extract_strided_slice %602 {offsets = [5, 0], sizes = [1, 8], strides = [1, 1]} : vector<8x8xf32> to vector<1x8xf32>
      %c3_172 = arith.constant 3 : index
      %c40_173 = arith.constant 40 : index
      %614 = vector.load %arg5[%c3_172, %c40_173] : memref<4x64xf32, #tpu.memory_space<vmem>>, vector<1x8xf32>
      tpu.vector_store %arg5[%c3_172, %c40_173], %613 {strides = array<i32>} : memref<4x64xf32, #tpu.memory_space<vmem>>, vector<1x8xf32>,
      %615 = vector.extract_strided_slice %602 {offsets = [6, 0], sizes = [1, 8], strides = [1, 1]} : vector<8x8xf32> to vector<1x8xf32>
      %c3_174 = arith.constant 3 : index
      %c48_175 = arith.constant 48 : index
      %616 = vector.load %arg5[%c3_174, %c48_175] : memref<4x64xf32, #tpu.memory_space<vmem>>, vector<1x8xf32>
      tpu.vector_store %arg5[%c3_174, %c48_175], %615 {strides = array<i32>} : memref<4x64xf32, #tpu.memory_space<vmem>>, vector<1x8xf32>,
      %617 = vector.extract_strided_slice %602 {offsets = [7, 0], sizes = [1, 8], strides = [1, 1]} : vector<8x8xf32> to vector<1x8xf32>
      %c3_176 = arith.constant 3 : index
      %c56_177 = arith.constant 56 : index
      %618 = vector.load %arg5[%c3_176, %c56_177] : memref<4x64xf32, #tpu.memory_space<vmem>>, vector<1x8xf32>
      tpu.vector_store %arg5[%c3_176, %c56_177], %617 {strides = array<i32>} : memref<4x64xf32, #tpu.memory_space<vmem>>, vector<1x8xf32>,
      %c0_178 = arith.constant 0 : index
      %c0_179 = arith.constant 0 : index
      %619 = vector.load %arg5[%c0_178, %c0_179] : memref<4x64xf32, #tpu.memory_space<vmem>>, vector<4x64xf32>
      %c0_180 = arith.constant 0 : index
      %c0_181 = arith.constant 0 : index
      %620 = vector.load %arg6[%c0_180, %c0_181] : memref<4x64xf32, #tpu.memory_space<vmem>>, vector<4x64xf32>
      tpu.vector_store %arg6[%c0_180, %c0_181], %619 {strides = array<i32>} : memref<4x64xf32, #tpu.memory_space<vmem>>, vector<4x64xf32>,
    } else {
    }
    %c0 = arith.constant 0 : index
    %c0_1 = arith.constant 0 : index
    %3 = vector.load %arg5[%c0, %c0_1] : memref<4x64xf32, #tpu.memory_space<vmem>>, vector<4x64xf32>
    %c0_2 = arith.constant 0 : index
    %c0_3 = arith.constant 0 : index
    %4 = vector.load %arg6[%c0_2, %c0_3] : memref<4x64xf32, #tpu.memory_space<vmem>>, vector<4x64xf32>
    %5 = vector.extract_strided_slice %3 {offsets = [0, 63], sizes = [4, 1], strides = [1, 1]} : vector<4x64xf32> to vector<4x1xf32>
    %6 = vector.extract_strided_slice %3 {offsets = [0, 0], sizes = [4, 63], strides = [1, 1]} : vector<4x64xf32> to vector<4x63xf32>
    %7 = tpu.concatenate %5, %6 in 1 : vector<4x1xf32>, vector<4x63xf32> -> vector<4x64xf32>
    %8 = vector.extract_strided_slice %3 {offsets = [0, 62], sizes = [4, 2], strides = [1, 1]} : vector<4x64xf32> to vector<4x2xf32>
    %9 = vector.extract_strided_slice %3 {offsets = [0, 0], sizes = [4, 62], strides = [1, 1]} : vector<4x64xf32> to vector<4x62xf32>
    %10 = tpu.concatenate %8, %9 in 1 : vector<4x2xf32>, vector<4x62xf32> -> vector<4x64xf32>
    %11 = vector.extract_strided_slice %3 {offsets = [0, 61], sizes = [4, 3], strides = [1, 1]} : vector<4x64xf32> to vector<4x3xf32>
    %12 = vector.extract_strided_slice %3 {offsets = [0, 0], sizes = [4, 61], strides = [1, 1]} : vector<4x64xf32> to vector<4x61xf32>
    %13 = tpu.concatenate %11, %12 in 1 : vector<4x3xf32>, vector<4x61xf32> -> vector<4x64xf32>
    %14 = vector.extract_strided_slice %3 {offsets = [0, 60], sizes = [4, 4], strides = [1, 1]} : vector<4x64xf32> to vector<4x4xf32>
    %15 = vector.extract_strided_slice %3 {offsets = [0, 0], sizes = [4, 60], strides = [1, 1]} : vector<4x64xf32> to vector<4x60xf32>
    %16 = tpu.concatenate %14, %15 in 1 : vector<4x4xf32>, vector<4x60xf32> -> vector<4x64xf32>
    %17 = vector.extract_strided_slice %3 {offsets = [0, 59], sizes = [4, 5], strides = [1, 1]} : vector<4x64xf32> to vector<4x5xf32>
    %18 = vector.extract_strided_slice %3 {offsets = [0, 0], sizes = [4, 59], strides = [1, 1]} : vector<4x64xf32> to vector<4x59xf32>
    %19 = tpu.concatenate %17, %18 in 1 : vector<4x5xf32>, vector<4x59xf32> -> vector<4x64xf32>
    %20 = vector.extract_strided_slice %3 {offsets = [0, 58], sizes = [4, 6], strides = [1, 1]} : vector<4x64xf32> to vector<4x6xf32>
    %21 = vector.extract_strided_slice %3 {offsets = [0, 0], sizes = [4, 58], strides = [1, 1]} : vector<4x64xf32> to vector<4x58xf32>
    %22 = tpu.concatenate %20, %21 in 1 : vector<4x6xf32>, vector<4x58xf32> -> vector<4x64xf32>
    %23 = vector.extract_strided_slice %3 {offsets = [0, 57], sizes = [4, 7], strides = [1, 1]} : vector<4x64xf32> to vector<4x7xf32>
    %24 = vector.extract_strided_slice %3 {offsets = [0, 0], sizes = [4, 57], strides = [1, 1]} : vector<4x64xf32> to vector<4x57xf32>
    %25 = tpu.concatenate %23, %24 in 1 : vector<4x7xf32>, vector<4x57xf32> -> vector<4x64xf32>
    %26 = vector.extract_strided_slice %3 {offsets = [0, 56], sizes = [4, 8], strides = [1, 1]} : vector<4x64xf32> to vector<4x8xf32>
    %27 = vector.extract_strided_slice %3 {offsets = [0, 0], sizes = [4, 56], strides = [1, 1]} : vector<4x64xf32> to vector<4x56xf32>
    %28 = tpu.concatenate %26, %27 in 1 : vector<4x8xf32>, vector<4x56xf32> -> vector<4x64xf32>
    %29 = vector.extract_strided_slice %3 {offsets = [0, 55], sizes = [4, 9], strides = [1, 1]} : vector<4x64xf32> to vector<4x9xf32>
    %30 = vector.extract_strided_slice %3 {offsets = [0, 0], sizes = [4, 55], strides = [1, 1]} : vector<4x64xf32> to vector<4x55xf32>
    %31 = tpu.concatenate %29, %30 in 1 : vector<4x9xf32>, vector<4x55xf32> -> vector<4x64xf32>
    %32 = vector.extract_strided_slice %3 {offsets = [0, 54], sizes = [4, 10], strides = [1, 1]} : vector<4x64xf32> to vector<4x10xf32>
    %33 = vector.extract_strided_slice %3 {offsets = [0, 0], sizes = [4, 54], strides = [1, 1]} : vector<4x64xf32> to vector<4x54xf32>
    %34 = tpu.concatenate %32, %33 in 1 : vector<4x10xf32>, vector<4x54xf32> -> vector<4x64xf32>
    %35 = vector.extract_strided_slice %3 {offsets = [0, 53], sizes = [4, 11], strides = [1, 1]} : vector<4x64xf32> to vector<4x11xf32>
    %36 = vector.extract_strided_slice %3 {offsets = [0, 0], sizes = [4, 53], strides = [1, 1]} : vector<4x64xf32> to vector<4x53xf32>
    %37 = tpu.concatenate %35, %36 in 1 : vector<4x11xf32>, vector<4x53xf32> -> vector<4x64xf32>
    %38 = vector.extract_strided_slice %3 {offsets = [0, 52], sizes = [4, 12], strides = [1, 1]} : vector<4x64xf32> to vector<4x12xf32>
    %39 = vector.extract_strided_slice %3 {offsets = [0, 0], sizes = [4, 52], strides = [1, 1]} : vector<4x64xf32> to vector<4x52xf32>
    %40 = tpu.concatenate %38, %39 in 1 : vector<4x12xf32>, vector<4x52xf32> -> vector<4x64xf32>
    %41 = vector.extract_strided_slice %3 {offsets = [0, 51], sizes = [4, 13], strides = [1, 1]} : vector<4x64xf32> to vector<4x13xf32>
    %42 = vector.extract_strided_slice %3 {offsets = [0, 0], sizes = [4, 51], strides = [1, 1]} : vector<4x64xf32> to vector<4x51xf32>
    %43 = tpu.concatenate %41, %42 in 1 : vector<4x13xf32>, vector<4x51xf32> -> vector<4x64xf32>
    %44 = vector.extract_strided_slice %3 {offsets = [0, 50], sizes = [4, 14], strides = [1, 1]} : vector<4x64xf32> to vector<4x14xf32>
    %45 = vector.extract_strided_slice %3 {offsets = [0, 0], sizes = [4, 50], strides = [1, 1]} : vector<4x64xf32> to vector<4x50xf32>
    %46 = tpu.concatenate %44, %45 in 1 : vector<4x14xf32>, vector<4x50xf32> -> vector<4x64xf32>
    %47 = vector.extract_strided_slice %3 {offsets = [0, 49], sizes = [4, 15], strides = [1, 1]} : vector<4x64xf32> to vector<4x15xf32>
    %48 = vector.extract_strided_slice %3 {offsets = [0, 0], sizes = [4, 49], strides = [1, 1]} : vector<4x64xf32> to vector<4x49xf32>
    %49 = tpu.concatenate %47, %48 in 1 : vector<4x15xf32>, vector<4x49xf32> -> vector<4x64xf32>
    %c0_4 = arith.constant 0 : index
    %c0_5 = arith.constant 0 : index
    %c0_6 = arith.constant 0 : index
    %50 = vector.load %arg7[%c0_4, %c0_5, %c0_6] : memref<4x4x64xf32, #tpu.memory_space<vmem>>, vector<1x4x64xf32>
    %51 = vector.shape_cast %50 : vector<1x4x64xf32> to vector<4x64xf32>
    %52 = vector.extract_strided_slice %4 {offsets = [0, 0], sizes = [1, 1], strides = [1, 1]} : vector<4x64xf32> to vector<1x1xf32>
    %53 = vector.broadcast %52 : vector<1x1xf32> to vector<4x64xf32>
    %54 = arith.mulf %53, %3 : vector<4x64xf32>
    %55 = arith.addf %51, %54 : vector<4x64xf32>
    %56 = vector.extract_strided_slice %4 {offsets = [0, 1], sizes = [1, 1], strides = [1, 1]} : vector<4x64xf32> to vector<1x1xf32>
    %57 = vector.broadcast %56 : vector<1x1xf32> to vector<4x64xf32>
    %58 = arith.mulf %57, %7 : vector<4x64xf32>
    %59 = arith.addf %55, %58 : vector<4x64xf32>
    %60 = vector.extract_strided_slice %4 {offsets = [0, 2], sizes = [1, 1], strides = [1, 1]} : vector<4x64xf32> to vector<1x1xf32>
    %61 = vector.broadcast %60 : vector<1x1xf32> to vector<4x64xf32>
    %62 = arith.mulf %61, %10 : vector<4x64xf32>
    %63 = arith.addf %59, %62 : vector<4x64xf32>
    %64 = vector.extract_strided_slice %4 {offsets = [0, 3], sizes = [1, 1], strides = [1, 1]} : vector<4x64xf32> to vector<1x1xf32>
    %65 = vector.broadcast %64 : vector<1x1xf32> to vector<4x64xf32>
    %66 = arith.mulf %65, %13 : vector<4x64xf32>
    %67 = arith.addf %63, %66 : vector<4x64xf32>
    %68 = vector.extract_strided_slice %4 {offsets = [0, 4], sizes = [1, 1], strides = [1, 1]} : vector<4x64xf32> to vector<1x1xf32>
    %69 = vector.broadcast %68 : vector<1x1xf32> to vector<4x64xf32>
    %70 = arith.mulf %69, %16 : vector<4x64xf32>
    %71 = arith.addf %67, %70 : vector<4x64xf32>
    %72 = vector.extract_strided_slice %4 {offsets = [0, 5], sizes = [1, 1], strides = [1, 1]} : vector<4x64xf32> to vector<1x1xf32>
    %73 = vector.broadcast %72 : vector<1x1xf32> to vector<4x64xf32>
    %74 = arith.mulf %73, %19 : vector<4x64xf32>
    %75 = arith.addf %71, %74 : vector<4x64xf32>
    %76 = vector.extract_strided_slice %4 {offsets = [0, 6], sizes = [1, 1], strides = [1, 1]} : vector<4x64xf32> to vector<1x1xf32>
    %77 = vector.broadcast %76 : vector<1x1xf32> to vector<4x64xf32>
    %78 = arith.mulf %77, %22 : vector<4x64xf32>
    %79 = arith.addf %75, %78 : vector<4x64xf32>
    %80 = vector.extract_strided_slice %4 {offsets = [0, 7], sizes = [1, 1], strides = [1, 1]} : vector<4x64xf32> to vector<1x1xf32>
    %81 = vector.broadcast %80 : vector<1x1xf32> to vector<4x64xf32>
    %82 = arith.mulf %81, %25 : vector<4x64xf32>
    %83 = arith.addf %79, %82 : vector<4x64xf32>
    %84 = vector.extract_strided_slice %4 {offsets = [0, 8], sizes = [1, 1], strides = [1, 1]} : vector<4x64xf32> to vector<1x1xf32>
    %85 = vector.broadcast %84 : vector<1x1xf32> to vector<4x64xf32>
    %86 = arith.mulf %85, %28 : vector<4x64xf32>
    %87 = arith.addf %83, %86 : vector<4x64xf32>
    %88 = vector.extract_strided_slice %4 {offsets = [0, 9], sizes = [1, 1], strides = [1, 1]} : vector<4x64xf32> to vector<1x1xf32>
    %89 = vector.broadcast %88 : vector<1x1xf32> to vector<4x64xf32>
    %90 = arith.mulf %89, %31 : vector<4x64xf32>
    %91 = arith.addf %87, %90 : vector<4x64xf32>
    %92 = vector.extract_strided_slice %4 {offsets = [0, 10], sizes = [1, 1], strides = [1, 1]} : vector<4x64xf32> to vector<1x1xf32>
    %93 = vector.broadcast %92 : vector<1x1xf32> to vector<4x64xf32>
    %94 = arith.mulf %93, %34 : vector<4x64xf32>
    %95 = arith.addf %91, %94 : vector<4x64xf32>
    %96 = vector.extract_strided_slice %4 {offsets = [0, 11], sizes = [1, 1], strides = [1, 1]} : vector<4x64xf32> to vector<1x1xf32>
    %97 = vector.broadcast %96 : vector<1x1xf32> to vector<4x64xf32>
    %98 = arith.mulf %97, %37 : vector<4x64xf32>
    %99 = arith.addf %95, %98 : vector<4x64xf32>
    %100 = vector.extract_strided_slice %4 {offsets = [0, 12], sizes = [1, 1], strides = [1, 1]} : vector<4x64xf32> to vector<1x1xf32>
    %101 = vector.broadcast %100 : vector<1x1xf32> to vector<4x64xf32>
    %102 = arith.mulf %101, %40 : vector<4x64xf32>
    %103 = arith.addf %99, %102 : vector<4x64xf32>
    %104 = vector.extract_strided_slice %4 {offsets = [0, 13], sizes = [1, 1], strides = [1, 1]} : vector<4x64xf32> to vector<1x1xf32>
    %105 = vector.broadcast %104 : vector<1x1xf32> to vector<4x64xf32>
    %106 = arith.mulf %105, %43 : vector<4x64xf32>
    %107 = arith.addf %103, %106 : vector<4x64xf32>
    %108 = vector.extract_strided_slice %4 {offsets = [0, 14], sizes = [1, 1], strides = [1, 1]} : vector<4x64xf32> to vector<1x1xf32>
    %109 = vector.broadcast %108 : vector<1x1xf32> to vector<4x64xf32>
    %110 = arith.mulf %109, %46 : vector<4x64xf32>
    %111 = arith.addf %107, %110 : vector<4x64xf32>
    %112 = vector.extract_strided_slice %4 {offsets = [0, 15], sizes = [1, 1], strides = [1, 1]} : vector<4x64xf32> to vector<1x1xf32>
    %113 = vector.broadcast %112 : vector<1x1xf32> to vector<4x64xf32>
    %114 = arith.mulf %113, %49 : vector<4x64xf32>
    %115 = arith.addf %111, %114 : vector<4x64xf32>
    %c0_7 = arith.constant 0 : index
    %c0_8 = arith.constant 0 : index
    %c0_9 = arith.constant 0 : index
    %116 = vector.load %arg7[%c0_7, %c0_8, %c0_9] : memref<4x4x64xf32, #tpu.memory_space<vmem>>, vector<1x4x64xf32>
    %117 = vector.shape_cast %116 : vector<1x4x64xf32> to vector<4x64xf32>
    %118 = vector.shape_cast %115 : vector<4x64xf32> to vector<1x4x64xf32>
    tpu.vector_store %arg7[%c0_7, %c0_8, %c0_9], %118 {strides = array<i32>} : memref<4x4x64xf32, #tpu.memory_space<vmem>>, vector<1x4x64xf32>,
    %c1 = arith.constant 1 : index
    %c0_10 = arith.constant 0 : index
    %c0_11 = arith.constant 0 : index
    %119 = vector.load %arg7[%c1, %c0_10, %c0_11] : memref<4x4x64xf32, #tpu.memory_space<vmem>>, vector<1x4x64xf32>
    %120 = vector.shape_cast %119 : vector<1x4x64xf32> to vector<4x64xf32>
    %121 = vector.extract_strided_slice %4 {offsets = [1, 0], sizes = [1, 1], strides = [1, 1]} : vector<4x64xf32> to vector<1x1xf32>
    %122 = vector.broadcast %121 : vector<1x1xf32> to vector<4x64xf32>
    %123 = arith.mulf %122, %3 : vector<4x64xf32>
    %124 = arith.addf %120, %123 : vector<4x64xf32>
    %125 = vector.extract_strided_slice %4 {offsets = [1, 1], sizes = [1, 1], strides = [1, 1]} : vector<4x64xf32> to vector<1x1xf32>
    %126 = vector.broadcast %125 : vector<1x1xf32> to vector<4x64xf32>
    %127 = arith.mulf %126, %7 : vector<4x64xf32>
    %128 = arith.addf %124, %127 : vector<4x64xf32>
    %129 = vector.extract_strided_slice %4 {offsets = [1, 2], sizes = [1, 1], strides = [1, 1]} : vector<4x64xf32> to vector<1x1xf32>
    %130 = vector.broadcast %129 : vector<1x1xf32> to vector<4x64xf32>
    %131 = arith.mulf %130, %10 : vector<4x64xf32>
    %132 = arith.addf %128, %131 : vector<4x64xf32>
    %133 = vector.extract_strided_slice %4 {offsets = [1, 3], sizes = [1, 1], strides = [1, 1]} : vector<4x64xf32> to vector<1x1xf32>
    %134 = vector.broadcast %133 : vector<1x1xf32> to vector<4x64xf32>
    %135 = arith.mulf %134, %13 : vector<4x64xf32>
    %136 = arith.addf %132, %135 : vector<4x64xf32>
    %137 = vector.extract_strided_slice %4 {offsets = [1, 4], sizes = [1, 1], strides = [1, 1]} : vector<4x64xf32> to vector<1x1xf32>
    %138 = vector.broadcast %137 : vector<1x1xf32> to vector<4x64xf32>
    %139 = arith.mulf %138, %16 : vector<4x64xf32>
    %140 = arith.addf %136, %139 : vector<4x64xf32>
    %141 = vector.extract_strided_slice %4 {offsets = [1, 5], sizes = [1, 1], strides = [1, 1]} : vector<4x64xf32> to vector<1x1xf32>
    %142 = vector.broadcast %141 : vector<1x1xf32> to vector<4x64xf32>
    %143 = arith.mulf %142, %19 : vector<4x64xf32>
    %144 = arith.addf %140, %143 : vector<4x64xf32>
    %145 = vector.extract_strided_slice %4 {offsets = [1, 6], sizes = [1, 1], strides = [1, 1]} : vector<4x64xf32> to vector<1x1xf32>
    %146 = vector.broadcast %145 : vector<1x1xf32> to vector<4x64xf32>
    %147 = arith.mulf %146, %22 : vector<4x64xf32>
    %148 = arith.addf %144, %147 : vector<4x64xf32>
    %149 = vector.extract_strided_slice %4 {offsets = [1, 7], sizes = [1, 1], strides = [1, 1]} : vector<4x64xf32> to vector<1x1xf32>
    %150 = vector.broadcast %149 : vector<1x1xf32> to vector<4x64xf32>
    %151 = arith.mulf %150, %25 : vector<4x64xf32>
    %152 = arith.addf %148, %151 : vector<4x64xf32>
    %153 = vector.extract_strided_slice %4 {offsets = [1, 8], sizes = [1, 1], strides = [1, 1]} : vector<4x64xf32> to vector<1x1xf32>
    %154 = vector.broadcast %153 : vector<1x1xf32> to vector<4x64xf32>
    %155 = arith.mulf %154, %28 : vector<4x64xf32>
    %156 = arith.addf %152, %155 : vector<4x64xf32>
    %157 = vector.extract_strided_slice %4 {offsets = [1, 9], sizes = [1, 1], strides = [1, 1]} : vector<4x64xf32> to vector<1x1xf32>
    %158 = vector.broadcast %157 : vector<1x1xf32> to vector<4x64xf32>
    %159 = arith.mulf %158, %31 : vector<4x64xf32>
    %160 = arith.addf %156, %159 : vector<4x64xf32>
    %161 = vector.extract_strided_slice %4 {offsets = [1, 10], sizes = [1, 1], strides = [1, 1]} : vector<4x64xf32> to vector<1x1xf32>
    %162 = vector.broadcast %161 : vector<1x1xf32> to vector<4x64xf32>
    %163 = arith.mulf %162, %34 : vector<4x64xf32>
    %164 = arith.addf %160, %163 : vector<4x64xf32>
    %165 = vector.extract_strided_slice %4 {offsets = [1, 11], sizes = [1, 1], strides = [1, 1]} : vector<4x64xf32> to vector<1x1xf32>
    %166 = vector.broadcast %165 : vector<1x1xf32> to vector<4x64xf32>
    %167 = arith.mulf %166, %37 : vector<4x64xf32>
    %168 = arith.addf %164, %167 : vector<4x64xf32>
    %169 = vector.extract_strided_slice %4 {offsets = [1, 12], sizes = [1, 1], strides = [1, 1]} : vector<4x64xf32> to vector<1x1xf32>
    %170 = vector.broadcast %169 : vector<1x1xf32> to vector<4x64xf32>
    %171 = arith.mulf %170, %40 : vector<4x64xf32>
    %172 = arith.addf %168, %171 : vector<4x64xf32>
    %173 = vector.extract_strided_slice %4 {offsets = [1, 13], sizes = [1, 1], strides = [1, 1]} : vector<4x64xf32> to vector<1x1xf32>
    %174 = vector.broadcast %173 : vector<1x1xf32> to vector<4x64xf32>
    %175 = arith.mulf %174, %43 : vector<4x64xf32>
    %176 = arith.addf %172, %175 : vector<4x64xf32>
    %177 = vector.extract_strided_slice %4 {offsets = [1, 14], sizes = [1, 1], strides = [1, 1]} : vector<4x64xf32> to vector<1x1xf32>
    %178 = vector.broadcast %177 : vector<1x1xf32> to vector<4x64xf32>
    %179 = arith.mulf %178, %46 : vector<4x64xf32>
    %180 = arith.addf %176, %179 : vector<4x64xf32>
    %181 = vector.extract_strided_slice %4 {offsets = [1, 15], sizes = [1, 1], strides = [1, 1]} : vector<4x64xf32> to vector<1x1xf32>
    %182 = vector.broadcast %181 : vector<1x1xf32> to vector<4x64xf32>
    %183 = arith.mulf %182, %49 : vector<4x64xf32>
    %184 = arith.addf %180, %183 : vector<4x64xf32>
    %c1_12 = arith.constant 1 : index
    %c0_13 = arith.constant 0 : index
    %c0_14 = arith.constant 0 : index
    %185 = vector.load %arg7[%c1_12, %c0_13, %c0_14] : memref<4x4x64xf32, #tpu.memory_space<vmem>>, vector<1x4x64xf32>
    %186 = vector.shape_cast %185 : vector<1x4x64xf32> to vector<4x64xf32>
    %187 = vector.shape_cast %184 : vector<4x64xf32> to vector<1x4x64xf32>
    tpu.vector_store %arg7[%c1_12, %c0_13, %c0_14], %187 {strides = array<i32>} : memref<4x4x64xf32, #tpu.memory_space<vmem>>, vector<1x4x64xf32>,
    %c2 = arith.constant 2 : index
    %c0_15 = arith.constant 0 : index
    %c0_16 = arith.constant 0 : index
    %188 = vector.load %arg7[%c2, %c0_15, %c0_16] : memref<4x4x64xf32, #tpu.memory_space<vmem>>, vector<1x4x64xf32>
    %189 = vector.shape_cast %188 : vector<1x4x64xf32> to vector<4x64xf32>
    %190 = vector.extract_strided_slice %4 {offsets = [2, 0], sizes = [1, 1], strides = [1, 1]} : vector<4x64xf32> to vector<1x1xf32>
    %191 = vector.broadcast %190 : vector<1x1xf32> to vector<4x64xf32>
    %192 = arith.mulf %191, %3 : vector<4x64xf32>
    %193 = arith.addf %189, %192 : vector<4x64xf32>
    %194 = vector.extract_strided_slice %4 {offsets = [2, 1], sizes = [1, 1], strides = [1, 1]} : vector<4x64xf32> to vector<1x1xf32>
    %195 = vector.broadcast %194 : vector<1x1xf32> to vector<4x64xf32>
    %196 = arith.mulf %195, %7 : vector<4x64xf32>
    %197 = arith.addf %193, %196 : vector<4x64xf32>
    %198 = vector.extract_strided_slice %4 {offsets = [2, 2], sizes = [1, 1], strides = [1, 1]} : vector<4x64xf32> to vector<1x1xf32>
    %199 = vector.broadcast %198 : vector<1x1xf32> to vector<4x64xf32>
    %200 = arith.mulf %199, %10 : vector<4x64xf32>
    %201 = arith.addf %197, %200 : vector<4x64xf32>
    %202 = vector.extract_strided_slice %4 {offsets = [2, 3], sizes = [1, 1], strides = [1, 1]} : vector<4x64xf32> to vector<1x1xf32>
    %203 = vector.broadcast %202 : vector<1x1xf32> to vector<4x64xf32>
    %204 = arith.mulf %203, %13 : vector<4x64xf32>
    %205 = arith.addf %201, %204 : vector<4x64xf32>
    %206 = vector.extract_strided_slice %4 {offsets = [2, 4], sizes = [1, 1], strides = [1, 1]} : vector<4x64xf32> to vector<1x1xf32>
    %207 = vector.broadcast %206 : vector<1x1xf32> to vector<4x64xf32>
    %208 = arith.mulf %207, %16 : vector<4x64xf32>
    %209 = arith.addf %205, %208 : vector<4x64xf32>
    %210 = vector.extract_strided_slice %4 {offsets = [2, 5], sizes = [1, 1], strides = [1, 1]} : vector<4x64xf32> to vector<1x1xf32>
    %211 = vector.broadcast %210 : vector<1x1xf32> to vector<4x64xf32>
    %212 = arith.mulf %211, %19 : vector<4x64xf32>
    %213 = arith.addf %209, %212 : vector<4x64xf32>
    %214 = vector.extract_strided_slice %4 {offsets = [2, 6], sizes = [1, 1], strides = [1, 1]} : vector<4x64xf32> to vector<1x1xf32>
    %215 = vector.broadcast %214 : vector<1x1xf32> to vector<4x64xf32>
    %216 = arith.mulf %215, %22 : vector<4x64xf32>
    %217 = arith.addf %213, %216 : vector<4x64xf32>
    %218 = vector.extract_strided_slice %4 {offsets = [2, 7], sizes = [1, 1], strides = [1, 1]} : vector<4x64xf32> to vector<1x1xf32>
    %219 = vector.broadcast %218 : vector<1x1xf32> to vector<4x64xf32>
    %220 = arith.mulf %219, %25 : vector<4x64xf32>
    %221 = arith.addf %217, %220 : vector<4x64xf32>
    %222 = vector.extract_strided_slice %4 {offsets = [2, 8], sizes = [1, 1], strides = [1, 1]} : vector<4x64xf32> to vector<1x1xf32>
    %223 = vector.broadcast %222 : vector<1x1xf32> to vector<4x64xf32>
    %224 = arith.mulf %223, %28 : vector<4x64xf32>
    %225 = arith.addf %221, %224 : vector<4x64xf32>
    %226 = vector.extract_strided_slice %4 {offsets = [2, 9], sizes = [1, 1], strides = [1, 1]} : vector<4x64xf32> to vector<1x1xf32>
    %227 = vector.broadcast %226 : vector<1x1xf32> to vector<4x64xf32>
    %228 = arith.mulf %227, %31 : vector<4x64xf32>
    %229 = arith.addf %225, %228 : vector<4x64xf32>
    %230 = vector.extract_strided_slice %4 {offsets = [2, 10], sizes = [1, 1], strides = [1, 1]} : vector<4x64xf32> to vector<1x1xf32>
    %231 = vector.broadcast %230 : vector<1x1xf32> to vector<4x64xf32>
    %232 = arith.mulf %231, %34 : vector<4x64xf32>
    %233 = arith.addf %229, %232 : vector<4x64xf32>
    %234 = vector.extract_strided_slice %4 {offsets = [2, 11], sizes = [1, 1], strides = [1, 1]} : vector<4x64xf32> to vector<1x1xf32>
    %235 = vector.broadcast %234 : vector<1x1xf32> to vector<4x64xf32>
    %236 = arith.mulf %235, %37 : vector<4x64xf32>
    %237 = arith.addf %233, %236 : vector<4x64xf32>
    %238 = vector.extract_strided_slice %4 {offsets = [2, 12], sizes = [1, 1], strides = [1, 1]} : vector<4x64xf32> to vector<1x1xf32>
    %239 = vector.broadcast %238 : vector<1x1xf32> to vector<4x64xf32>
    %240 = arith.mulf %239, %40 : vector<4x64xf32>
    %241 = arith.addf %237, %240 : vector<4x64xf32>
    %242 = vector.extract_strided_slice %4 {offsets = [2, 13], sizes = [1, 1], strides = [1, 1]} : vector<4x64xf32> to vector<1x1xf32>
    %243 = vector.broadcast %242 : vector<1x1xf32> to vector<4x64xf32>
    %244 = arith.mulf %243, %43 : vector<4x64xf32>
    %245 = arith.addf %241, %244 : vector<4x64xf32>
    %246 = vector.extract_strided_slice %4 {offsets = [2, 14], sizes = [1, 1], strides = [1, 1]} : vector<4x64xf32> to vector<1x1xf32>
    %247 = vector.broadcast %246 : vector<1x1xf32> to vector<4x64xf32>
    %248 = arith.mulf %247, %46 : vector<4x64xf32>
    %249 = arith.addf %245, %248 : vector<4x64xf32>
    %250 = vector.extract_strided_slice %4 {offsets = [2, 15], sizes = [1, 1], strides = [1, 1]} : vector<4x64xf32> to vector<1x1xf32>
    %251 = vector.broadcast %250 : vector<1x1xf32> to vector<4x64xf32>
    %252 = arith.mulf %251, %49 : vector<4x64xf32>
    %253 = arith.addf %249, %252 : vector<4x64xf32>
    %c2_17 = arith.constant 2 : index
    %c0_18 = arith.constant 0 : index
    %c0_19 = arith.constant 0 : index
    %254 = vector.load %arg7[%c2_17, %c0_18, %c0_19] : memref<4x4x64xf32, #tpu.memory_space<vmem>>, vector<1x4x64xf32>
    %255 = vector.shape_cast %254 : vector<1x4x64xf32> to vector<4x64xf32>
    %256 = vector.shape_cast %253 : vector<4x64xf32> to vector<1x4x64xf32>
    tpu.vector_store %arg7[%c2_17, %c0_18, %c0_19], %256 {strides = array<i32>} : memref<4x4x64xf32, #tpu.memory_space<vmem>>, vector<1x4x64xf32>,
    %c3 = arith.constant 3 : index
    %c0_20 = arith.constant 0 : index
    %c0_21 = arith.constant 0 : index
    %257 = vector.load %arg7[%c3, %c0_20, %c0_21] : memref<4x4x64xf32, #tpu.memory_space<vmem>>, vector<1x4x64xf32>
    %258 = vector.shape_cast %257 : vector<1x4x64xf32> to vector<4x64xf32>
    %259 = vector.extract_strided_slice %4 {offsets = [3, 0], sizes = [1, 1], strides = [1, 1]} : vector<4x64xf32> to vector<1x1xf32>
    %260 = vector.broadcast %259 : vector<1x1xf32> to vector<4x64xf32>
    %261 = arith.mulf %260, %3 : vector<4x64xf32>
    %262 = arith.addf %258, %261 : vector<4x64xf32>
    %263 = vector.extract_strided_slice %4 {offsets = [3, 1], sizes = [1, 1], strides = [1, 1]} : vector<4x64xf32> to vector<1x1xf32>
    %264 = vector.broadcast %263 : vector<1x1xf32> to vector<4x64xf32>
    %265 = arith.mulf %264, %7 : vector<4x64xf32>
    %266 = arith.addf %262, %265 : vector<4x64xf32>
    %267 = vector.extract_strided_slice %4 {offsets = [3, 2], sizes = [1, 1], strides = [1, 1]} : vector<4x64xf32> to vector<1x1xf32>
    %268 = vector.broadcast %267 : vector<1x1xf32> to vector<4x64xf32>
    %269 = arith.mulf %268, %10 : vector<4x64xf32>
    %270 = arith.addf %266, %269 : vector<4x64xf32>
    %271 = vector.extract_strided_slice %4 {offsets = [3, 3], sizes = [1, 1], strides = [1, 1]} : vector<4x64xf32> to vector<1x1xf32>
    %272 = vector.broadcast %271 : vector<1x1xf32> to vector<4x64xf32>
    %273 = arith.mulf %272, %13 : vector<4x64xf32>
    %274 = arith.addf %270, %273 : vector<4x64xf32>
    %275 = vector.extract_strided_slice %4 {offsets = [3, 4], sizes = [1, 1], strides = [1, 1]} : vector<4x64xf32> to vector<1x1xf32>
    %276 = vector.broadcast %275 : vector<1x1xf32> to vector<4x64xf32>
    %277 = arith.mulf %276, %16 : vector<4x64xf32>
    %278 = arith.addf %274, %277 : vector<4x64xf32>
    %279 = vector.extract_strided_slice %4 {offsets = [3, 5], sizes = [1, 1], strides = [1, 1]} : vector<4x64xf32> to vector<1x1xf32>
    %280 = vector.broadcast %279 : vector<1x1xf32> to vector<4x64xf32>
    %281 = arith.mulf %280, %19 : vector<4x64xf32>
    %282 = arith.addf %278, %281 : vector<4x64xf32>
    %283 = vector.extract_strided_slice %4 {offsets = [3, 6], sizes = [1, 1], strides = [1, 1]} : vector<4x64xf32> to vector<1x1xf32>
    %284 = vector.broadcast %283 : vector<1x1xf32> to vector<4x64xf32>
    %285 = arith.mulf %284, %22 : vector<4x64xf32>
    %286 = arith.addf %282, %285 : vector<4x64xf32>
    %287 = vector.extract_strided_slice %4 {offsets = [3, 7], sizes = [1, 1], strides = [1, 1]} : vector<4x64xf32> to vector<1x1xf32>
    %288 = vector.broadcast %287 : vector<1x1xf32> to vector<4x64xf32>
    %289 = arith.mulf %288, %25 : vector<4x64xf32>
    %290 = arith.addf %286, %289 : vector<4x64xf32>
    %291 = vector.extract_strided_slice %4 {offsets = [3, 8], sizes = [1, 1], strides = [1, 1]} : vector<4x64xf32> to vector<1x1xf32>
    %292 = vector.broadcast %291 : vector<1x1xf32> to vector<4x64xf32>
    %293 = arith.mulf %292, %28 : vector<4x64xf32>
    %294 = arith.addf %290, %293 : vector<4x64xf32>
    %295 = vector.extract_strided_slice %4 {offsets = [3, 9], sizes = [1, 1], strides = [1, 1]} : vector<4x64xf32> to vector<1x1xf32>
    %296 = vector.broadcast %295 : vector<1x1xf32> to vector<4x64xf32>
    %297 = arith.mulf %296, %31 : vector<4x64xf32>
    %298 = arith.addf %294, %297 : vector<4x64xf32>
    %299 = vector.extract_strided_slice %4 {offsets = [3, 10], sizes = [1, 1], strides = [1, 1]} : vector<4x64xf32> to vector<1x1xf32>
    %300 = vector.broadcast %299 : vector<1x1xf32> to vector<4x64xf32>
    %301 = arith.mulf %300, %34 : vector<4x64xf32>
    %302 = arith.addf %298, %301 : vector<4x64xf32>
    %303 = vector.extract_strided_slice %4 {offsets = [3, 11], sizes = [1, 1], strides = [1, 1]} : vector<4x64xf32> to vector<1x1xf32>
    %304 = vector.broadcast %303 : vector<1x1xf32> to vector<4x64xf32>
    %305 = arith.mulf %304, %37 : vector<4x64xf32>
    %306 = arith.addf %302, %305 : vector<4x64xf32>
    %307 = vector.extract_strided_slice %4 {offsets = [3, 12], sizes = [1, 1], strides = [1, 1]} : vector<4x64xf32> to vector<1x1xf32>
    %308 = vector.broadcast %307 : vector<1x1xf32> to vector<4x64xf32>
    %309 = arith.mulf %308, %40 : vector<4x64xf32>
    %310 = arith.addf %306, %309 : vector<4x64xf32>
    %311 = vector.extract_strided_slice %4 {offsets = [3, 13], sizes = [1, 1], strides = [1, 1]} : vector<4x64xf32> to vector<1x1xf32>
    %312 = vector.broadcast %311 : vector<1x1xf32> to vector<4x64xf32>
    %313 = arith.mulf %312, %43 : vector<4x64xf32>
    %314 = arith.addf %310, %313 : vector<4x64xf32>
    %315 = vector.extract_strided_slice %4 {offsets = [3, 14], sizes = [1, 1], strides = [1, 1]} : vector<4x64xf32> to vector<1x1xf32>
    %316 = vector.broadcast %315 : vector<1x1xf32> to vector<4x64xf32>
    %317 = arith.mulf %316, %46 : vector<4x64xf32>
    %318 = arith.addf %314, %317 : vector<4x64xf32>
    %319 = vector.extract_strided_slice %4 {offsets = [3, 15], sizes = [1, 1], strides = [1, 1]} : vector<4x64xf32> to vector<1x1xf32>
    %320 = vector.broadcast %319 : vector<1x1xf32> to vector<4x64xf32>
    %321 = arith.mulf %320, %49 : vector<4x64xf32>
    %322 = arith.addf %318, %321 : vector<4x64xf32>
    %c3_22 = arith.constant 3 : index
    %c0_23 = arith.constant 0 : index
    %c0_24 = arith.constant 0 : index
    %323 = vector.load %arg7[%c3_22, %c0_23, %c0_24] : memref<4x4x64xf32, #tpu.memory_space<vmem>>, vector<1x4x64xf32>
    %324 = vector.shape_cast %323 : vector<1x4x64xf32> to vector<4x64xf32>
    %325 = vector.shape_cast %322 : vector<4x64xf32> to vector<1x4x64xf32>
    tpu.vector_store %arg7[%c3_22, %c0_23, %c0_24], %325 {strides = array<i32>} : memref<4x4x64xf32, #tpu.memory_space<vmem>>, vector<1x4x64xf32>,
    %326 = vector.extract_strided_slice %3 {offsets = [0, 48], sizes = [4, 16], strides = [1, 1]} : vector<4x64xf32> to vector<4x16xf32>
    %327 = vector.extract_strided_slice %3 {offsets = [0, 0], sizes = [4, 48], strides = [1, 1]} : vector<4x64xf32> to vector<4x48xf32>
    %328 = tpu.concatenate %326, %327 in 1 : vector<4x16xf32>, vector<4x48xf32> -> vector<4x64xf32>
    %c0_25 = arith.constant 0 : index
    %c0_26 = arith.constant 0 : index
    %329 = vector.load %arg5[%c0_25, %c0_26] : memref<4x64xf32, #tpu.memory_space<vmem>>, vector<4x64xf32>
    tpu.vector_store %arg5[%c0_25, %c0_26], %328 {strides = array<i32>} : memref<4x64xf32, #tpu.memory_space<vmem>>, vector<4x64xf32>,
    %330 = vector.extract_strided_slice %4 {offsets = [0, 16], sizes = [4, 48], strides = [1, 1]} : vector<4x64xf32> to vector<4x48xf32>
    %331 = vector.extract_strided_slice %4 {offsets = [0, 0], sizes = [4, 16], strides = [1, 1]} : vector<4x64xf32> to vector<4x16xf32>
    %332 = tpu.concatenate %330, %331 in 1 : vector<4x48xf32>, vector<4x16xf32> -> vector<4x64xf32>
    %c0_27 = arith.constant 0 : index
    %c0_28 = arith.constant 0 : index
    %333 = vector.load %arg6[%c0_27, %c0_28] : memref<4x64xf32, #tpu.memory_space<vmem>>, vector<4x64xf32>
    tpu.vector_store %arg6[%c0_27, %c0_28], %332 {strides = array<i32>} : memref<4x64xf32, #tpu.memory_space<vmem>>, vector<4x64xf32>,
    %c3_i32 = arith.constant 3 : i32
    %334 = arith.cmpi eq, %arg1, %c3_i32 : i32
    %335 = arith.extui %334 : i1 to i32
    %c0_i32_29 = arith.constant 0 : i32
    %336 = arith.cmpi ne, %335, %c0_i32_29 : i32
    scf.if %336 {
      %c0_30 = arith.constant 0 : index
      %c0_31 = arith.constant 0 : index
      %c0_32 = arith.constant 0 : index
      %337 = vector.load %arg7[%c0_30, %c0_31, %c0_32] : memref<4x4x64xf32, #tpu.memory_space<vmem>>, vector<4x4x64xf32>
      %cst = arith.constant dense<0xFF800000> : vector<4x64xf32>
      %338 = vector.multi_reduction <maximumf>, %337, %cst [0] : vector<4x4x64xf32> to vector<4x64xf32>
      %cst_33 = arith.constant dense<0xFF800000> : vector<64xf32>
      %339 = vector.multi_reduction <maximumf>, %338, %cst_33 [0] : vector<4x64xf32> to vector<64xf32>
      %340 = vector.shape_cast %339 : vector<64xf32> to vector<1x64xf32>
      %341 = vector.extract_strided_slice %340 {offsets = [0, 0], sizes = [1, 16], strides = [1, 1]} : vector<1x64xf32> to vector<1x16xf32>
      %342 = vector.extract_strided_slice %340 {offsets = [0, 16], sizes = [1, 16], strides = [1, 1]} : vector<1x64xf32> to vector<1x16xf32>
      %343 = arith.maximumf %341, %342 : vector<1x16xf32>
      %344 = vector.extract_strided_slice %340 {offsets = [0, 32], sizes = [1, 16], strides = [1, 1]} : vector<1x64xf32> to vector<1x16xf32>
      %345 = arith.maximumf %343, %344 : vector<1x16xf32>
      %346 = vector.extract_strided_slice %340 {offsets = [0, 48], sizes = [1, 16], strides = [1, 1]} : vector<1x64xf32> to vector<1x16xf32>
      %347 = arith.maximumf %345, %346 : vector<1x16xf32>
      %348 = math.sqrt %347 : vector<1x16xf32>
      %349 = arith.mulf %348, %348 : vector<1x16xf32>
      %cst_34 = arith.constant dense<0.000000e+00> : vector<1xf32>
      %350 = vector.multi_reduction <add>, %349, %cst_34 [1] : vector<1x16xf32> to vector<1xf32>
      %351 = vector.shape_cast %350 : vector<1xf32> to vector<1x1xf32>
      %cst_35 = arith.constant 9.99999996E-12 : f32
      %352 = vector.broadcast %cst_35 : f32 to vector<1x1xf32>
      %353 = arith.addf %351, %352 : vector<1x1xf32>
      %354 = tpu.reciprocal %353 {approx = true} : vector<1x1xf32> -> vector<1x1xf32>
      %355 = vector.broadcast %354 : vector<1x1xf32> to vector<1x16xf32>
      %356 = arith.mulf %348, %355 : vector<1x16xf32>
      %c0_36 = arith.constant 0 : index
      %c0_37 = arith.constant 0 : index
      %c0_38 = arith.constant 0 : index
      %357 = vector.load %arg4[%c0_36, %c0_37, %c0_38] : memref<1x1x16xf32, #tpu.memory_space<vmem>>, vector<1x1x16xf32>
      %358 = vector.shape_cast %357 : vector<1x1x16xf32> to vector<1x16xf32>
      %359 = vector.shape_cast %356 : vector<1x16xf32> to vector<1x1x16xf32>
      tpu.vector_store %arg4[%c0_36, %c0_37, %c0_38], %359 {strides = array<i32>} : memref<1x1x16xf32, #tpu.memory_space<vmem>>, vector<1x1x16xf32>,
    } else {
    }
    return
  }
  func.func @transform_0(%arg0: i32, %arg1: i32) -> (i32, i32, i32, i32) {
    %c0_i32 = arith.constant 0 : i32
    %c0_i32_0 = arith.constant 0 : i32
    %c0_i32_1 = arith.constant 0 : i32
    %c0_i32_2 = arith.constant 0 : i32
    return %arg0, %c0_i32, %c0_i32_0, %c0_i32_1 : i32, i32, i32, i32
  }
  func.func @transform_1(%arg0: i32, %arg1: i32) -> (i32, i32) {
    %c0_i32 = arith.constant 0 : i32
    %c0_i32_0 = arith.constant 0 : i32
    %c0_i32_1 = arith.constant 0 : i32
    return %c0_i32, %c0_i32_0 : i32, i32
  }
  func.func @transform_2(%arg0: i32, %arg1: i32) -> (i32, i32, i32) {
    %c0_i32 = arith.constant 0 : i32
    %c0_i32_0 = arith.constant 0 : i32
    %c0_i32_1 = arith.constant 0 : i32
    return %arg0, %c0_i32, %c0_i32_0 : i32, i32, i32
  }
}

</mosaic_0001>

<llo_original>
// kernel: cooc_layer.1
$region0: #{cooc_layer.1}
  #allocation0 [shape = 'u32[]', space=smem, size = 0x4, offset = 0x4, fixed_abs, tag = 'smem constant byte address 0x4 - core index']
  #allocation1 [shape = 'u32[144,128]{1,0:T(1,128)}', space=vmem, size = 0x12000, scoped, tag = 'internal scratch']
  #allocation2 [shape = 'f32[4,64]{1,0:T(4,128)}', space=vmem, size = 0x800, scoped, tag = 'scratch operand']
  #allocation3 [shape = 'f32[4,64]{1,0:T(4,128)}', space=vmem, size = 0x800, scoped, tag = 'scratch operand']
  #allocation4 [shape = 'f32[4,4,64]{2,1,0:T(4,128)}', space=vmem, size = 0x2000, scoped, tag = 'scratch operand']
  %s0 = inlined_call_operand.vmem [shape: f32[2,4,10,10], index: 0, kind: input, shape index: {}]
  %s1 = inlined_call_operand.vmem [shape: f32[4,4], index: 1, kind: input, shape index: {}]
  %s2 = inlined_call_operand.hbm [shape: f32[2,1,16], index: 2, kind: output, shape index: {}]
  %s3 = sld [smem:[#allocation0]]
  $region53: #{cooc_layer.1} parent=0
    _
  %s5 = ssub.s32 1, %s3
  %s6 = scalar_select 0, %s5, %s3
  $region1: #{cooc_layer.1} parent=0
    #allocation5 [shape = 'u8[2048]{0}', space=smem, size = 0x800, scoped, tag = 'input window, operand 1, single buffered']
    #allocation6 [shape = 's32[2]{0}', space=sflag, size = 0x8, scoped, tag = 'scoped memory for cooc_layer.1']
    #allocation7 [shape = 's32[2]{0}', space=sflag, size = 0x8, scoped, tag = 'scoped memory for cooc_layer.1']
    #allocation8 [shape = 'u8[1024]{0}', space=vmem, size = 0x400, scoped, tag = 'output window, operand 0']
    %7 = vsyncpa [#allocation7], 0
    %8 = vsyncpa [#allocation6], 0
    %s9 = scalar_lea.sflag [#allocation6], 1
    %10 = vsyncpa %s9, 0
    loop: start=0, step=1, limit=10
    $region2: #{cooc_layer.1} parent=1 // loop_pre_header
      _
    $region3: #{cooc_layer.1} parent=1 // loop_header
      %s12 = sphi 0, %s16
      %p13 = scmp.ge.s32.totalorder %s12, 10
      %s19 = sphi 0, %s31
      %s20 = sphi 0, %s27
      %s21 = sphi 0, %s19
      %s22 = sphi 0, %s20
      %s23 = sphi 0, %s21
      %s24 = sphi 0, %s22
      %s34 = sphi 0, %s36
      %s37 = sphi 0, %s34
      %s38 = sphi 0, %s37
      %s54 = sphi 0, %s38
      %s58 = sphi 0, %s58
      %s60 = sphi 0, %s58
      %s61 = sphi 0, %s60
      %s75 = sphi 0, %s61
      %s81 = sphi 0, %s83
      %s84 = sphi 0, %s81
      %s85 = sphi 0, %s84
      %s101 = sphi 0, %s85
    $region4: #{cooc_layer.1} parent=1 // loop_header_branch
      %15 = sbr.rel (%p13) target = $region8
    $region5: #{cooc_layer.1} parent=1 // loop_body
      %s17 = ssub.s32 %s12, 1
      %s18 = ssub.s32 %s12, 2
      %s25 = sadd.s32 1, %s20
      %p26 = scmp.ge.s32.totalorder %s25, 4
      %s27 = scalar_select %p26, 0, %s25
      %s28 = sadd.s32 1, %s19
      %s29 = scalar_select %p26, %s28, %s19
      %p30 = scmp.ge.s32.totalorder %s29, 2
      %s31 = scalar_select %p30, 0, %s29
      %s32 = ssub.s32 %s19, %s31
      %p33 = scmp.eq.s32.totalorder %s32, 0
      %s35 = sadd.s32 %s34, 1
      %s36 = scalar_select %p33, %s34, %s35
      %p39 = pneg %p33
      %p40 = scmp.eq.s32.totalorder %s12, 7
      %p41 = por %p39, %p40
      %p42 = scmp.ne.s32.totalorder %s34, %s37
      %p43 = scmp.eq.s32.totalorder %s12, 0
      %p44 = por %p42, %p43
      %p45 = scmp.ne.s32.totalorder %s34, %s37
      %p46 = scmp.eq.s32.totalorder %s17, 7
      %p47 = por %p45, %p46
      %p48 = scmp.ne.s32.totalorder %s37, %s38
      %p49 = scmp.eq.s32.totalorder %s17, 0
      %p50 = por %p48, %p49
      %p51 = scmp.ne.s32.totalorder %s37, %s38
      %p52 = scmp.eq.s32.totalorder %s18, 7
      %p53 = por %p51, %p52
      %p55 = scmp.ne.s32.totalorder %s38, %s54
      %p56 = scmp.eq.s32.totalorder %s18, 0
      %p57 = por %p55, %p56
      %s59 = sadd.s32 %s58, 1
      %p62 = scmp.eq.s32.totalorder %s12, 7
      %p63 = scmp.ne.s32.totalorder %s58, %s60
      %p64 = scmp.eq.s32.totalorder %s12, 0
      %p65 = por %p63, %p64
      %p66 = scmp.ne.s32.totalorder %s58, %s60
      %p67 = scmp.eq.s32.totalorder %s17, 7
      %p68 = por %p66, %p67
      %p69 = scmp.ne.s32.totalorder %s60, %s61
      %p70 = scmp.eq.s32.totalorder %s17, 0
      %p71 = por %p69, %p70
      %p72 = scmp.ne.s32.totalorder %s60, %s61
      %p73 = scmp.eq.s32.totalorder %s18, 7
      %p74 = por %p72, %p73
      %p76 = scmp.ne.s32.totalorder %s61, %s75
      %p77 = scmp.eq.s32.totalorder %s18, 0
      %p78 = por %p76, %p77
      %s79 = ssub.s32 %s19, %s31
      %p80 = scmp.eq.s32.totalorder %s79, 0
      %s82 = sadd.s32 %s81, 1
      %s83 = scalar_select %p80, %s81, %s82
      %p86 = pneg %p80
      %p87 = scmp.eq.s32.totalorder %s12, 7
      %p88 = por %p86, %p87
      %p89 = scmp.ne.s32.totalorder %s81, %s84
      %p90 = scmp.eq.s32.totalorder %s12, 0
      %p91 = por %p89, %p90
      %p92 = scmp.ne.s32.totalorder %s81, %s84
      %p93 = scmp.eq.s32.totalorder %s17, 7
      %p94 = por %p92, %p93
      %p95 = scmp.ne.s32.totalorder %s84, %s85
      %p96 = scmp.eq.s32.totalorder %s17, 0
      %p97 = por %p95, %p96
      %p98 = scmp.ne.s32.totalorder %s84, %s85
      %p99 = scmp.eq.s32.totalorder %s18, 7
      %p100 = por %p98, %p99
      %p102 = scmp.ne.s32.totalorder %s85, %s101
      %p103 = scmp.eq.s32.totalorder %s18, 0
      %p104 = por %p102, %p103
      %p105 = scmp.le.s32.totalorder 1, %s12
      %p106 = scmp.lt.s32.totalorder %s12, 9
      %p107 = pnand %p105, %p106
      %p108 = pneg %p107
      // Predicated region
      $region9: #{cooc_layer.1} parent=5 // pred_check
        _
      $region10: #{cooc_layer.1} parent=5 // pred_check_branch
        %110 = sbr.rel (%p107) target = $region12
      $region11: #{cooc_layer.1} parent=5 // pred_region
        %s111 = ssub.s32 %s12, 1
        // Predicated region
        $region13: #{cooc_layer.1} parent=11 // pred_check
          %p112 = pneg %p71
        $region14: #{cooc_layer.1} parent=11 // pred_check_branch
          %114 = sbr.rel (%p112) target = $region16
        $region15: #{cooc_layer.1} parent=11 // pred_region
          %s116 = ssub.s32 64, 64
          %117 = vsyncadd [#allocation7], %s116
          %s119 = sshll.u32 %s1, 4
          %s120 = int_to_ptr.vmem [resolvable:$true] %s119
          %122 = dma.vmem_to_smem %s120, 64, [#allocation5], [#allocation7]
        $region16: #{cooc_layer.1} parent=11 // pred_fallthru
          _
      $region12: #{cooc_layer.1} parent=5 // pred_fallthru
        _
      %p123 = scmp.lt.s32.totalorder %s12, 8
      // Predicated region
      $region17: #{cooc_layer.1} parent=5 // pred_check
        %p124 = pneg %p123
      $region18: #{cooc_layer.1} parent=5 // pred_check_branch
        %126 = sbr.rel (%p124) target = $region20
      $region19: #{cooc_layer.1} parent=5 // pred_region
        // Predicated region
        $region21: #{cooc_layer.1} parent=19 // pred_check
          %p127 = pneg %p44
        $region22: #{cooc_layer.1} parent=19 // pred_check_branch
          %129 = sbr.rel (%p127) target = $region24
        $region23: #{cooc_layer.1} parent=19 // pred_region
          %p130 = scmp.lt.s32.totalorder %s19, 1
          %s131 = scalar_select %p130, %s19, 1
          %s132 = smul.addr %s131, 8
          %s133 = smul.addr %s132, 8
          %s134 = scalar_lea.vmem %s0, %s133
        $region24: #{cooc_layer.1} parent=19 // pred_fallthru
          _
      $region20: #{cooc_layer.1} parent=5 // pred_fallthru
        _
      %p135 = scmp.le.s32.totalorder 1, %s12
      %p136 = scmp.lt.s32.totalorder %s12, 9
      %p137 = pnand %p135, %p136
      %p138 = pneg %p137
      // Predicated region
      $region25: #{cooc_layer.1} parent=5 // pred_check
        _
      $region26: #{cooc_layer.1} parent=5 // pred_check_branch
        %140 = sbr.rel (%p137) target = $region28
      $region27: #{cooc_layer.1} parent=5 // pred_region
        %s141 = ssub.s32 %s12, 1
        // Predicated region
        $region29: #{cooc_layer.1} parent=27 // pred_check
          %p142 = pneg %p71
        $region30: #{cooc_layer.1} parent=27 // pred_check_branch
          %144 = sbr.rel (%p142) target = $region32
        $region31: #{cooc_layer.1} parent=27 // pred_region
          %145 = dma.done [#allocation7], 64
        $region32: #{cooc_layer.1} parent=27 // pred_fallthru
          _
        %146 = sfence
        %p147 = scmp.lt.s32.totalorder %s21, 1
        %s148 = scalar_select %p147, %s21, 1
        %s149 = smul.addr %s148, 8
        %s150 = smul.addr %s149, 8
        %s151 = scalar_lea.vmem %s0, %s150
        %p152 = pneg %p50
        %p153 = pneg %p47
        %p154 = pneg %p71
        %p155 = pneg %p68
        %p156 = pneg %p97
        %p157 = pneg %p94
        %s158 = sand.u32 %s84, 1
        %s159 = scalar_lea.sflag [#allocation6], %s158
        %s160 = sand.u32 %s84, 1
        %s161 = scalar_lea.vmem [#allocation8], %s160
        %p162 = scmp.lt.s32.totalorder %s21, 1
        %s163 = scalar_select %p162, %s21, 1
        %s164 = smul.addr %s163, 8
        %s165 = smul.addr %s164, 8
        %s166 = scalar_lea.vmem %s0, %s165
        %p167 = scmp.eq.s32.totalorder %s22, 0
        // Predicated region
        $region33: #{cooc_layer.1} parent=27 // pred_check
          %p168 = pneg %p167
        $region34: #{cooc_layer.1} parent=27 // pred_check_branch
          %170 = sbr.rel (%p168) target = $region36
        $region35: #{cooc_layer.1} parent=27 // pred_region
          %vm171 = vcmask 519168
          %172 = vst.msk [vmem:[#allocation4] sm:$0xf] %vm171, 0.0
          %173 = vst.msk [vmem:[#allocation4 + $0x4] sm:$0xf] %vm171, 0.0
          %174 = vst.msk [vmem:[#allocation4 + $0x8] sm:$0xf] %vm171, 0.0
          %175 = vst.msk [vmem:[#allocation4 + $0xc] sm:$0xf] %vm171, 0.0
          %v176 = vld [vmem:[%s166] sm:$0xff]
          %v177 = vld [vmem:[%s166 + $0x8] sm:$0x3]
          %s178 = scalar_lea.vmem %s166, 16
          %v179 = vld [vmem:[%s178] sm:$0xff]
          %v180 = vld [vmem:[%s178 + $0x8] sm:$0x3]
          %s181 = scalar_lea.vmem %s166, 32
          %v182 = vld [vmem:[%s181] sm:$0xff]
          %v183 = vld [vmem:[%s181 + $0x8] sm:$0x3]
          %s184 = scalar_lea.vmem %s166, 48
          %v185 = vld [vmem:[%s184] sm:$0xff]
          %v186 = vld [vmem:[%s184 + $0x8] sm:$0x3]
          %s187 = sld [smem:[#allocation5]]
          %v188 = vstv %s187
          %v189 = vmul.f32 %v188, %v176
          %v190 = vmul.f32 %v188, %v177
          %s191 = sld [smem:[#allocation5 + $0x1]]
          %v192 = vstv %s191
          %v193 = vmul.f32 %v192, %v179
          %v194 = vmul.f32 %v192, %v180
          %v195 = vadd.f32 %v189, %v193
          %v196 = vadd.f32 %v190, %v194
          %s197 = sld [smem:[#allocation5 + $0x2]]
          %v198 = vstv %s197
          %v199 = vmul.f32 %v198, %v182
          %v200 = vmul.f32 %v198, %v183
          %v201 = vadd.f32 %v195, %v199
          %v202 = vadd.f32 %v196, %v200
          %s203 = sld [smem:[#allocation5 + $0x3]]
          %v204 = vstv %s203
          %v205 = vmul.f32 %v204, %v185
          %v206 = vmul.f32 %v204, %v186
          %v207 = vadd.f32 %v201, %v205
          %v208 = vadd.f32 %v202, %v206
          %v209 = vmax.f32 %v207, 0.0
          %v210 = vmax.f32 %v208, 0.0
          %v211 = vmul.f32 %v209, 0.011660098
          %v212 = vmul.f32 %v209, 0.08615712
          %214 = vrot.lane.b32.xlu0 %v212, 127
          %v215 = vpop.permute.xlu0 %214
          %v217 = vadd.f32 %v211, %v215
          %219 = vrot.lane.b32.xlu0 %v211, 126
          %v220 = vpop.permute.xlu0 %219
          %v222 = vadd.f32 %v217, %v220
          %v223 = vmul.f32 %v210, 0.08615712
          %vm225 = vcmask 1046528
          %v226 = vrot.slane %v212, 1
          %v227 = vrot.slane %v223, 1
          %v228 = vsel %vm225, %v226, %v227
          %v230 = vadd.f32 %v222, %v228
          %v231 = vmul.f32 %v209, 0.63661975
          %v232 = vmul.f32 %v210, 0.63661975
          %v235 = vrot.slane %v231, 1
          %v236 = vrot.slane %v232, 1
          %v237 = vsel %vm225, %v235, %v236
          %238 = vrot.lane.b32.xlu0 %v237, 127
          %v239 = vpop.permute.xlu0 %238
          %v241 = vadd.f32 %v230, %v239
          %242 = vrot.lane.b32.xlu0 %v228, 126
          %v243 = vpop.permute.xlu0 %242
          %v245 = vadd.f32 %v241, %v243
          %v246 = vmul.f32 %v210, 0.011660098
          %vm248 = vcmask 1045504
          %v249 = vrot.slane %v211, 2
          %v250 = vrot.slane %v246, 2
          %v251 = vsel %vm248, %v249, %v250
          %v253 = vadd.f32 %v245, %v251
          %v254 = vrot.slane %v212, 2
          %v255 = vrot.slane %v223, 2
          %v256 = vsel %vm248, %v254, %v255
          %257 = vrot.lane.b32.xlu0 %v256, 127
          %v258 = vpop.permute.xlu0 %257
          %v260 = vadd.f32 %v253, %v258
          %261 = vrot.lane.b32.xlu0 %v251, 126
          %v262 = vpop.permute.xlu0 %261
          %v264 = vadd.f32 %v260, %v262
          %vm265 = vcmask 57344
          %266 = vst.msk [vmem:[#allocation2] sm:$0x1] %vm265, %v264
          %268 = vrot.lane.b32.xlu0 %v264, 8
          %v269 = vpop.permute.xlu0 %268
          %vm271 = vcmask 123969
          %272 = vst.msk [vmem:[#allocation2 - $0x1] sm:$0x2] %vm271, %v269
          %273 = vrot.lane.b32.xlu0 %v264, 16
          %v274 = vpop.permute.xlu0 %273
          %vm276 = vcmask 190594
          %277 = vst.msk [vmem:[#allocation2 - $0x2] sm:$0x4] %vm276, %v274
          %278 = vrot.lane.b32.xlu0 %v264, 24
          %v279 = vpop.permute.xlu0 %278
          %vm281 = vcmask 257219
          %282 = vst.msk [vmem:[#allocation2 - $0x3] sm:$0x8] %vm281, %v279
          %283 = vrot.lane.b32.xlu0 %v264, 32
          %v284 = vpop.permute.xlu0 %283
          %vm286 = vcmask 323844
          %287 = vst.msk [vmem:[#allocation2 - $0x4] sm:$0x10] %vm286, %v284
          %288 = vrot.lane.b32.xlu0 %v264, 40
          %v289 = vpop.permute.xlu0 %288
          %vm291 = vcmask 390469
          %292 = vst.msk [vmem:[#allocation2 - $0x5] sm:$0x20] %vm291, %v289
          %293 = vrot.lane.b32.xlu0 %v264, 48
          %v294 = vpop.permute.xlu0 %293
          %vm296 = vcmask 457094
          %297 = vst.msk [vmem:[#allocation2 - $0x6] sm:$0x40] %vm296, %v294
          %298 = vrot.lane.b32.xlu0 %v264, 56
          %v299 = vpop.permute.xlu0 %298
          %vm301 = vcmask 523719
          %302 = vst.msk [vmem:[#allocation2 - $0x7] sm:$0x80] %vm301, %v299
          %s303 = sld [smem:[#allocation5 + $0x80]]
          %v304 = vstv %s303
          %v305 = vmul.f32 %v304, %v176
          %v306 = vmul.f32 %v304, %v177
          %s307 = sld [smem:[#allocation5 + $0x81]]
          %v308 = vstv %s307
          %v309 = vmul.f32 %v308, %v179
          %v310 = vmul.f32 %v308, %v180
          %v311 = vadd.f32 %v305, %v309
          %v312 = vadd.f32 %v306, %v310
          %s313 = sld [smem:[#allocation5 + $0x82]]
          %v314 = vstv %s313
          %v315 = vmul.f32 %v314, %v182
          %v316 = vmul.f32 %v314, %v183
          %v317 = vadd.f32 %v311, %v315
          %v318 = vadd.f32 %v312, %v316
          %s319 = sld [smem:[#allocation5 + $0x83]]
          %v320 = vstv %s319
          %v321 = vmul.f32 %v320, %v185
          %v322 = vmul.f32 %v320, %v186
          %v323 = vadd.f32 %v317, %v321
          %v324 = vadd.f32 %v318, %v322
          %v325 = vmax.f32 %v323, 0.0
          %v326 = vmax.f32 %v324, 0.0
          %v327 = vmul.f32 %v325, 0.011660098
          %v328 = vmul.f32 %v325, 0.08615712
          %330 = vrot.lane.b32.xlu0 %v328, 127
          %v331 = vpop.permute.xlu0 %330
          %v333 = vadd.f32 %v327, %v331
          %335 = vrot.lane.b32.xlu0 %v327, 126
          %v336 = vpop.permute.xlu0 %335
          %v338 = vadd.f32 %v333, %v336
          %v339 = vmul.f32 %v326, 0.08615712
          %v341 = vrot.slane %v328, 1
          %v342 = vrot.slane %v339, 1
          %v343 = vsel %vm225, %v341, %v342
          %v345 = vadd.f32 %v338, %v343
          %v346 = vmul.f32 %v325, 0.63661975
          %v347 = vmul.f32 %v326, 0.63661975
          %v350 = vrot.slane %v346, 1
          %v351 = vrot.slane %v347, 1
          %v352 = vsel %vm225, %v350, %v351
          %353 = vrot.lane.b32.xlu0 %v352, 127
          %v354 = vpop.permute.xlu0 %353
          %v356 = vadd.f32 %v345, %v354
          %357 = vrot.lane.b32.xlu0 %v343, 126
          %v358 = vpop.permute.xlu0 %357
          %v360 = vadd.f32 %v356, %v358
          %v361 = vmul.f32 %v326, 0.011660098
          %v363 = vrot.slane %v327, 2
          %v364 = vrot.slane %v361, 2
          %v365 = vsel %vm248, %v363, %v364
          %v367 = vadd.f32 %v360, %v365
          %v368 = vrot.slane %v328, 2
          %v369 = vrot.slane %v339, 2
          %v370 = vsel %vm248, %v368, %v369
          %371 = vrot.lane.b32.xlu0 %v370, 127
          %v372 = vpop.permute.xlu0 %371
          %v374 = vadd.f32 %v367, %v372
          %375 = vrot.lane.b32.xlu0 %v365, 126
          %v376 = vpop.permute.xlu0 %375
          %v378 = vadd.f32 %v374, %v376
          %379 = vst.msk [vmem:[#allocation2 + $0x1] sm:$0x1] %vm265, %v378
          %381 = vrot.lane.b32.xlu0 %v378, 8
          %v382 = vpop.permute.xlu0 %381
          %384 = vst.msk [vmem:[#allocation2] sm:$0x2] %vm271, %v382
          %385 = vrot.lane.b32.xlu0 %v378, 16
          %v386 = vpop.permute.xlu0 %385
          %388 = vst.msk [vmem:[#allocation2 - $0x1] sm:$0x4] %vm276, %v386
          %389 = vrot.lane.b32.xlu0 %v378, 24
          %v390 = vpop.permute.xlu0 %389
          %392 = vst.msk [vmem:[#allocation2 - $0x2] sm:$0x8] %vm281, %v390
          %393 = vrot.lane.b32.xlu0 %v378, 32
          %v394 = vpop.permute.xlu0 %393
          %396 = vst.msk [vmem:[#allocation2 - $0x3] sm:$0x10] %vm286, %v394
          %397 = vrot.lane.b32.xlu0 %v378, 40
          %v398 = vpop.permute.xlu0 %397
          %400 = vst.msk [vmem:[#allocation2 - $0x4] sm:$0x20] %vm291, %v398
          %401 = vrot.lane.b32.xlu0 %v378, 48
          %v402 = vpop.permute.xlu0 %401
          %404 = vst.msk [vmem:[#allocation2 - $0x5] sm:$0x40] %vm296, %v402
          %405 = vrot.lane.b32.xlu0 %v378, 56
          %v406 = vpop.permute.xlu0 %405
          %408 = vst.msk [vmem:[#allocation2 - $0x6] sm:$0x80] %vm301, %v406
          %s409 = sld [smem:[#allocation5 + $0x100]]
          %v410 = vstv %s409
          %v411 = vmul.f32 %v410, %v176
          %v412 = vmul.f32 %v410, %v177
          %s413 = sld [smem:[#allocation5 + $0x101]]
          %v414 = vstv %s413
          %v415 = vmul.f32 %v414, %v179
          %v416 = vmul.f32 %v414, %v180
          %v417 = vadd.f32 %v411, %v415
          %v418 = vadd.f32 %v412, %v416
          %s419 = sld [smem:[#allocation5 + $0x102]]
          %v420 = vstv %s419
          %v421 = vmul.f32 %v420, %v182
          %v422 = vmul.f32 %v420, %v183
          %v423 = vadd.f32 %v417, %v421
          %v424 = vadd.f32 %v418, %v422
          %s425 = sld [smem:[#allocation5 + $0x103]]
          %v426 = vstv %s425
          %v427 = vmul.f32 %v426, %v185
          %v428 = vmul.f32 %v426, %v186
          %v429 = vadd.f32 %v423, %v427
          %v430 = vadd.f32 %v424, %v428
          %v431 = vmax.f32 %v429, 0.0
          %v432 = vmax.f32 %v430, 0.0
          %v433 = vmul.f32 %v431, 0.011660098
          %v434 = vmul.f32 %v431, 0.08615712
          %436 = vrot.lane.b32.xlu0 %v434, 127
          %v437 = vpop.permute.xlu0 %436
          %v439 = vadd.f32 %v433, %v437
          %441 = vrot.lane.b32.xlu0 %v433, 126
          %v442 = vpop.permute.xlu0 %441
          %v444 = vadd.f32 %v439, %v442
          %v445 = vmul.f32 %v432, 0.08615712
          %v447 = vrot.slane %v434, 1
          %v448 = vrot.slane %v445, 1
          %v449 = vsel %vm225, %v447, %v448
          %v451 = vadd.f32 %v444, %v449
          %v452 = vmul.f32 %v431, 0.63661975
          %v453 = vmul.f32 %v432, 0.63661975
          %v456 = vrot.slane %v452, 1
          %v457 = vrot.slane %v453, 1
          %v458 = vsel %vm225, %v456, %v457
          %459 = vrot.lane.b32.xlu0 %v458, 127
          %v460 = vpop.permute.xlu0 %459
          %v462 = vadd.f32 %v451, %v460
          %463 = vrot.lane.b32.xlu0 %v449, 126
          %v464 = vpop.permute.xlu0 %463
          %v466 = vadd.f32 %v462, %v464
          %v467 = vmul.f32 %v432, 0.011660098
          %v469 = vrot.slane %v433, 2
          %v470 = vrot.slane %v467, 2
          %v471 = vsel %vm248, %v469, %v470
          %v473 = vadd.f32 %v466, %v471
          %v474 = vrot.slane %v434, 2
          %v475 = vrot.slane %v445, 2
          %v476 = vsel %vm248, %v474, %v475
          %477 = vrot.lane.b32.xlu0 %v476, 127
          %v478 = vpop.permute.xlu0 %477
          %v480 = vadd.f32 %v473, %v478
          %481 = vrot.lane.b32.xlu0 %v471, 126
          %v482 = vpop.permute.xlu0 %481
          %v484 = vadd.f32 %v480, %v482
          %485 = vst.msk [vmem:[#allocation2 + $0x2] sm:$0x1] %vm265, %v484
          %487 = vrot.lane.b32.xlu0 %v484, 8
          %v488 = vpop.permute.xlu0 %487
          %490 = vst.msk [vmem:[#allocation2 + $0x1] sm:$0x2] %vm271, %v488
          %491 = vrot.lane.b32.xlu0 %v484, 16
          %v492 = vpop.permute.xlu0 %491
          %494 = vst.msk [vmem:[#allocation2] sm:$0x4] %vm276, %v492
          %495 = vrot.lane.b32.xlu0 %v484, 24
          %v496 = vpop.permute.xlu0 %495
          %498 = vst.msk [vmem:[#allocation2 - $0x1] sm:$0x8] %vm281, %v496
          %499 = vrot.lane.b32.xlu0 %v484, 32
          %v500 = vpop.permute.xlu0 %499
          %502 = vst.msk [vmem:[#allocation2 - $0x2] sm:$0x10] %vm286, %v500
          %503 = vrot.lane.b32.xlu0 %v484, 40
          %v504 = vpop.permute.xlu0 %503
          %506 = vst.msk [vmem:[#allocation2 - $0x3] sm:$0x20] %vm291, %v504
          %507 = vrot.lane.b32.xlu0 %v484, 48
          %v508 = vpop.permute.xlu0 %507
          %510 = vst.msk [vmem:[#allocation2 - $0x4] sm:$0x40] %vm296, %v508
          %511 = vrot.lane.b32.xlu0 %v484, 56
          %v512 = vpop.permute.xlu0 %511
          %514 = vst.msk [vmem:[#allocation2 - $0x5] sm:$0x80] %vm301, %v512
          %s515 = sld [smem:[#allocation5 + $0x180]]
          %v516 = vstv %s515
          %v517 = vmul.f32 %v516, %v176
          %v518 = vmul.f32 %v516, %v177
          %s519 = sld [smem:[#allocation5 + $0x181]]
          %v520 = vstv %s519
          %v521 = vmul.f32 %v520, %v179
          %v522 = vmul.f32 %v520, %v180
          %v523 = vadd.f32 %v517, %v521
          %v524 = vadd.f32 %v518, %v522
          %s525 = sld [smem:[#allocation5 + $0x182]]
          %v526 = vstv %s525
          %v527 = vmul.f32 %v526, %v182
          %v528 = vmul.f32 %v526, %v183
          %v529 = vadd.f32 %v523, %v527
          %v530 = vadd.f32 %v524, %v528
          %s531 = sld [smem:[#allocation5 + $0x183]]
          %v532 = vstv %s531
          %v533 = vmul.f32 %v532, %v185
          %v534 = vmul.f32 %v532, %v186
          %v535 = vadd.f32 %v529, %v533
          %v536 = vadd.f32 %v530, %v534
          %v537 = vmax.f32 %v535, 0.0
          %v538 = vmax.f32 %v536, 0.0
          %v539 = vmul.f32 %v537, 0.011660098
          %v540 = vmul.f32 %v537, 0.08615712
          %542 = vrot.lane.b32.xlu0 %v540, 127
          %v543 = vpop.permute.xlu0 %542
          %v545 = vadd.f32 %v539, %v543
          %547 = vrot.lane.b32.xlu0 %v539, 126
          %v548 = vpop.permute.xlu0 %547
          %v550 = vadd.f32 %v545, %v548
          %v551 = vmul.f32 %v538, 0.08615712
          %v553 = vrot.slane %v540, 1
          %v554 = vrot.slane %v551, 1
          %v555 = vsel %vm225, %v553, %v554
          %v557 = vadd.f32 %v550, %v555
          %v558 = vmul.f32 %v537, 0.63661975
          %v559 = vmul.f32 %v538, 0.63661975
          %v562 = vrot.slane %v558, 1
          %v563 = vrot.slane %v559, 1
          %v564 = vsel %vm225, %v562, %v563
          %565 = vrot.lane.b32.xlu0 %v564, 127
          %v566 = vpop.permute.xlu0 %565
          %v568 = vadd.f32 %v557, %v566
          %569 = vrot.lane.b32.xlu0 %v555, 126
          %v570 = vpop.permute.xlu0 %569
          %v572 = vadd.f32 %v568, %v570
          %v573 = vmul.f32 %v538, 0.011660098
          %v575 = vrot.slane %v539, 2
          %v576 = vrot.slane %v573, 2
          %v577 = vsel %vm248, %v575, %v576
          %v579 = vadd.f32 %v572, %v577
          %v580 = vrot.slane %v540, 2
          %v581 = vrot.slane %v551, 2
          %v582 = vsel %vm248, %v580, %v581
          %583 = vrot.lane.b32.xlu0 %v582, 127
          %v584 = vpop.permute.xlu0 %583
          %v586 = vadd.f32 %v579, %v584
          %587 = vrot.lane.b32.xlu0 %v577, 126
          %v588 = vpop.permute.xlu0 %587
          %v590 = vadd.f32 %v586, %v588
          %591 = vst.msk [vmem:[#allocation2 + $0x3] sm:$0x1] %vm265, %v590
          %593 = vrot.lane.b32.xlu0 %v590, 8
          %v594 = vpop.permute.xlu0 %593
          %596 = vst.msk [vmem:[#allocation2 + $0x2] sm:$0x2] %vm271, %v594
          %597 = vrot.lane.b32.xlu0 %v590, 16
          %v598 = vpop.permute.xlu0 %597
          %600 = vst.msk [vmem:[#allocation2 + $0x1] sm:$0x4] %vm276, %v598
          %601 = vrot.lane.b32.xlu0 %v590, 24
          %v602 = vpop.permute.xlu0 %601
          %604 = vst.msk [vmem:[#allocation2] sm:$0x8] %vm281, %v602
          %605 = vrot.lane.b32.xlu0 %v590, 32
          %v606 = vpop.permute.xlu0 %605
          %608 = vst.msk [vmem:[#allocation2 - $0x1] sm:$0x10] %vm286, %v606
          %609 = vrot.lane.b32.xlu0 %v590, 40
          %v610 = vpop.permute.xlu0 %609
          %612 = vst.msk [vmem:[#allocation2 - $0x2] sm:$0x20] %vm291, %v610
          %613 = vrot.lane.b32.xlu0 %v590, 48
          %v614 = vpop.permute.xlu0 %613
          %616 = vst.msk [vmem:[#allocation2 - $0x3] sm:$0x40] %vm296, %v614
          %617 = vrot.lane.b32.xlu0 %v590, 56
          %v618 = vpop.permute.xlu0 %617
          %620 = vst.msk [vmem:[#allocation2 - $0x4] sm:$0x80] %vm301, %v618
          %v621 = vld [vmem:[#allocation2] sm:$0xf]
          %622 = vst.msk [vmem:[#allocation3] sm:$0xf] %vm171, %v621
        $region36: #{cooc_layer.1} parent=27 // pred_fallthru
          _
        %v623 = vld [vmem:[#allocation2] sm:$0xf]
        %v624 = vld [vmem:[#allocation3] sm:$0xf]
        %626 = vrot.lane.b32.xlu0 %v623, 65
        %v627 = vpop.permute.xlu0 %626
        %629 = vrot.lane.b32.xlu0 %v623, 1
        %v630 = vpop.permute.xlu0 %629
        %vm632 = vcmask 7168
        %v633 = vsel %vm632, %v627, %v630
        %634 = vrot.lane.b32.xlu0 %v623, 66
        %v635 = vpop.permute.xlu0 %634
        %637 = vrot.lane.b32.xlu0 %v623, 2
        %v638 = vpop.permute.xlu0 %637
        %vm640 = vcmask 15360
        %v641 = vsel %vm640, %v635, %v638
        %642 = vrot.lane.b32.xlu0 %v623, 67
        %v643 = vpop.permute.xlu0 %642
        %645 = vrot.lane.b32.xlu0 %v623, 3
        %v646 = vpop.permute.xlu0 %645
        %vm648 = vcmask 23552
        %v649 = vsel %vm648, %v643, %v646
        %650 = vrot.lane.b32.xlu0 %v623, 68
        %v651 = vpop.permute.xlu0 %650
        %653 = vrot.lane.b32.xlu0 %v623, 4
        %v654 = vpop.permute.xlu0 %653
        %vm656 = vcmask 31744
        %v657 = vsel %vm656, %v651, %v654
        %658 = vrot.lane.b32.xlu0 %v623, 69
        %v659 = vpop.permute.xlu0 %658
        %661 = vrot.lane.b32.xlu0 %v623, 5
        %v662 = vpop.permute.xlu0 %661
        %vm664 = vcmask 39936
        %v665 = vsel %vm664, %v659, %v662
        %666 = vrot.lane.b32.xlu0 %v623, 70
        %v667 = vpop.permute.xlu0 %666
        %669 = vrot.lane.b32.xlu0 %v623, 6
        %v670 = vpop.permute.xlu0 %669
        %vm672 = vcmask 48128
        %v673 = vsel %vm672, %v667, %v670
        %674 = vrot.lane.b32.xlu0 %v623, 71
        %v675 = vpop.permute.xlu0 %674
        %677 = vrot.lane.b32.xlu0 %v623, 7
        %v678 = vpop.permute.xlu0 %677
        %vm680 = vcmask 56320
        %v681 = vsel %vm680, %v675, %v678
        %682 = vrot.lane.b32.xlu0 %v623, 72
        %v683 = vpop.permute.xlu0 %682
        %685 = vrot.lane.b32.xlu0 %v623, 8
        %v686 = vpop.permute.xlu0 %685
        %vm688 = vcmask 64512
        %v689 = vsel %vm688, %v683, %v686
        %690 = vrot.lane.b32.xlu0 %v623, 73
        %v691 = vpop.permute.xlu0 %690
        %693 = vrot.lane.b32.xlu0 %v623, 9
        %v694 = vpop.permute.xlu0 %693
        %vm696 = vcmask 72704
        %v697 = vsel %vm696, %v691, %v694
        %698 = vrot.lane.b32.xlu0 %v623, 74
        %v699 = vpop.permute.xlu0 %698
        %701 = vrot.lane.b32.xlu0 %v623, 10
        %v702 = vpop.permute.xlu0 %701
        %vm704 = vcmask 80896
        %v705 = vsel %vm704, %v699, %v702
        %706 = vrot.lane.b32.xlu0 %v623, 75
        %v707 = vpop.permute.xlu0 %706
        %709 = vrot.lane.b32.xlu0 %v623, 11
        %v710 = vpop.permute.xlu0 %709
        %vm712 = vcmask 89088
        %v713 = vsel %vm712, %v707, %v710
        %714 = vrot.lane.b32.xlu0 %v623, 76
        %v715 = vpop.permute.xlu0 %714
        %717 = vrot.lane.b32.xlu0 %v623, 12
        %v718 = vpop.permute.xlu0 %717
        %vm720 = vcmask 97280
        %v721 = vsel %vm720, %v715, %v718
        %722 = vrot.lane.b32.xlu0 %v623, 77
        %v723 = vpop.permute.xlu0 %722
        %725 = vrot.lane.b32.xlu0 %v623, 13
        %v726 = vpop.permute.xlu0 %725
        %vm728 = vcmask 105472
        %v729 = vsel %vm728, %v723, %v726
        %730 = vrot.lane.b32.xlu0 %v623, 78
        %v731 = vpop.permute.xlu0 %730
        %733 = vrot.lane.b32.xlu0 %v623, 14
        %v734 = vpop.permute.xlu0 %733
        %vm736 = vcmask 113664
        %v737 = vsel %vm736, %v731, %v734
        %738 = vrot.lane.b32.xlu0 %v623, 79
        %v739 = vpop.permute.xlu0 %738
        %741 = vrot.lane.b32.xlu0 %v623, 15
        %v742 = vpop.permute.xlu0 %741
        %vm744 = vcmask 121856
        %v745 = vsel %vm744, %v739, %v742
        %v746 = vld [vmem:[#allocation4] sm:$0xf]
        %s748 = vtos %v624
        %v749 = vstv %s748
        %v751 = vmul.f32 %v749, %v623
        %v752 = vadd.f32 %v746, %v751
        %753 = vrot.lane.b32.xlu0 %v624, 127
        %v754 = vpop.permute.xlu0 %753
        %s755 = vtos %v754
        %v756 = vstv %s755
        %v758 = vmul.f32 %v756, %v633
        %v759 = vadd.f32 %v752, %v758
        %760 = vrot.lane.b32.xlu0 %v624, 126
        %v761 = vpop.permute.xlu0 %760
        %s762 = vtos %v761
        %v763 = vstv %s762
        %v765 = vmul.f32 %v763, %v641
        %v766 = vadd.f32 %v759, %v765
        %767 = vrot.lane.b32.xlu0 %v624, 125
        %v768 = vpop.permute.xlu0 %767
        %s769 = vtos %v768
        %v770 = vstv %s769
        %v772 = vmul.f32 %v770, %v649
        %v773 = vadd.f32 %v766, %v772
        %774 = vrot.lane.b32.xlu0 %v624, 124
        %v775 = vpop.permute.xlu0 %774
        %s776 = vtos %v775
        %v777 = vstv %s776
        %v779 = vmul.f32 %v777, %v657
        %v780 = vadd.f32 %v773, %v779
        %781 = vrot.lane.b32.xlu0 %v624, 123
        %v782 = vpop.permute.xlu0 %781
        %s783 = vtos %v782
        %v784 = vstv %s783
        %v786 = vmul.f32 %v784, %v665
        %v787 = vadd.f32 %v780, %v786
        %788 = vrot.lane.b32.xlu0 %v624, 122
        %v789 = vpop.permute.xlu0 %788
        %s790 = vtos %v789
        %v791 = vstv %s790
        %v793 = vmul.f32 %v791, %v673
        %v794 = vadd.f32 %v787, %v793
        %795 = vrot.lane.b32.xlu0 %v624, 121
        %v796 = vpop.permute.xlu0 %795
        %s797 = vtos %v796
        %v798 = vstv %s797
        %v800 = vmul.f32 %v798, %v681
        %v801 = vadd.f32 %v794, %v800
        %802 = vrot.lane.b32.xlu0 %v624, 120
        %v803 = vpop.permute.xlu0 %802
        %s804 = vtos %v803
        %v805 = vstv %s804
        %v807 = vmul.f32 %v805, %v689
        %v808 = vadd.f32 %v801, %v807
        %809 = vrot.lane.b32.xlu0 %v624, 119
        %v810 = vpop.permute.xlu0 %809
        %s811 = vtos %v810
        %v812 = vstv %s811
        %v814 = vmul.f32 %v812, %v697
        %v815 = vadd.f32 %v808, %v814
        %816 = vrot.lane.b32.xlu0 %v624, 118
        %v817 = vpop.permute.xlu0 %816
        %s818 = vtos %v817
        %v819 = vstv %s818
        %v821 = vmul.f32 %v819, %v705
        %v822 = vadd.f32 %v815, %v821
        %823 = vrot.lane.b32.xlu0 %v624, 117
        %v824 = vpop.permute.xlu0 %823
        %s825 = vtos %v824
        %v826 = vstv %s825
        %v828 = vmul.f32 %v826, %v713
        %v829 = vadd.f32 %v822, %v828
        %830 = vrot.lane.b32.xlu0 %v624, 116
        %v831 = vpop.permute.xlu0 %830
        %s832 = vtos %v831
        %v833 = vstv %s832
        %v835 = vmul.f32 %v833, %v721
        %v836 = vadd.f32 %v829, %v835
        %837 = vrot.lane.b32.xlu0 %v624, 115
        %v838 = vpop.permute.xlu0 %837
        %s839 = vtos %v838
        %v840 = vstv %s839
        %v842 = vmul.f32 %v840, %v729
        %v843 = vadd.f32 %v836, %v842
        %844 = vrot.lane.b32.xlu0 %v624, 114
        %v845 = vpop.permute.xlu0 %844
        %s846 = vtos %v845
        %v847 = vstv %s846
        %v849 = vmul.f32 %v847, %v737
        %v850 = vadd.f32 %v843, %v849
        %851 = vrot.lane.b32.xlu0 %v624, 113
        %v852 = vpop.permute.xlu0 %851
        %s853 = vtos %v852
        %v854 = vstv %s853
        %v856 = vmul.f32 %v854, %v745
        %v857 = vadd.f32 %v850, %v856
        %vm858 = vcmask 519168
        %859 = vst.msk [vmem:[#allocation4] sm:$0xf] %vm858, %v857
        %s860 = scalar_lea.vmem [#allocation4], 4
        %v861 = vld [vmem:[%s860] sm:$0xf]
        %v862 = vrot.slane %v624, 1
        %s863 = vtos %v862
        %v864 = vstv %s863
        %v866 = vmul.f32 %v864, %v623
        %v867 = vadd.f32 %v861, %v866
        %868 = vrot.lane.b32.xlu0 %v862, 127
        %v869 = vpop.permute.xlu0 %868
        %s870 = vtos %v869
        %v871 = vstv %s870
        %v873 = vmul.f32 %v871, %v633
        %v874 = vadd.f32 %v867, %v873
        %875 = vrot.lane.b32.xlu0 %v862, 126
        %v876 = vpop.permute.xlu0 %875
        %s877 = vtos %v876
        %v878 = vstv %s877
        %v880 = vmul.f32 %v878, %v641
        %v881 = vadd.f32 %v874, %v880
        %882 = vrot.lane.b32.xlu0 %v862, 125
        %v883 = vpop.permute.xlu0 %882
        %s884 = vtos %v883
        %v885 = vstv %s884
        %v887 = vmul.f32 %v885, %v649
        %v888 = vadd.f32 %v881, %v887
        %889 = vrot.lane.b32.xlu0 %v862, 124
        %v890 = vpop.permute.xlu0 %889
        %s891 = vtos %v890
        %v892 = vstv %s891
        %v894 = vmul.f32 %v892, %v657
        %v895 = vadd.f32 %v888, %v894
        %896 = vrot.lane.b32.xlu0 %v862, 123
        %v897 = vpop.permute.xlu0 %896
        %s898 = vtos %v897
        %v899 = vstv %s898
        %v901 = vmul.f32 %v899, %v665
        %v902 = vadd.f32 %v895, %v901
        %903 = vrot.lane.b32.xlu0 %v862, 122
        %v904 = vpop.permute.xlu0 %903
        %s905 = vtos %v904
        %v906 = vstv %s905
        %v908 = vmul.f32 %v906, %v673
        %v909 = vadd.f32 %v902, %v908
        %910 = vrot.lane.b32.xlu0 %v862, 121
        %v911 = vpop.permute.xlu0 %910
        %s912 = vtos %v911
        %v913 = vstv %s912
        %v915 = vmul.f32 %v913, %v681
        %v916 = vadd.f32 %v909, %v915
        %917 = vrot.lane.b32.xlu0 %v862, 120
        %v918 = vpop.permute.xlu0 %917
        %s919 = vtos %v918
        %v920 = vstv %s919
        %v922 = vmul.f32 %v920, %v689
        %v923 = vadd.f32 %v916, %v922
        %924 = vrot.lane.b32.xlu0 %v862, 119
        %v925 = vpop.permute.xlu0 %924
        %s926 = vtos %v925
        %v927 = vstv %s926
        %v929 = vmul.f32 %v927, %v697
        %v930 = vadd.f32 %v923, %v929
        %931 = vrot.lane.b32.xlu0 %v862, 118
        %v932 = vpop.permute.xlu0 %931
        %s933 = vtos %v932
        %v934 = vstv %s933
        %v936 = vmul.f32 %v934, %v705
        %v937 = vadd.f32 %v930, %v936
        %938 = vrot.lane.b32.xlu0 %v862, 117
        %v939 = vpop.permute.xlu0 %938
        %s940 = vtos %v939
        %v941 = vstv %s940
        %v943 = vmul.f32 %v941, %v713
        %v944 = vadd.f32 %v937, %v943
        %945 = vrot.lane.b32.xlu0 %v862, 116
        %v946 = vpop.permute.xlu0 %945
        %s947 = vtos %v946
        %v948 = vstv %s947
        %v950 = vmul.f32 %v948, %v721
        %v951 = vadd.f32 %v944, %v950
        %952 = vrot.lane.b32.xlu0 %v862, 115
        %v953 = vpop.permute.xlu0 %952
        %s954 = vtos %v953
        %v955 = vstv %s954
        %v957 = vmul.f32 %v955, %v729
        %v958 = vadd.f32 %v951, %v957
        %959 = vrot.lane.b32.xlu0 %v862, 114
        %v960 = vpop.permute.xlu0 %959
        %s961 = vtos %v960
        %v962 = vstv %s961
        %v964 = vmul.f32 %v962, %v737
        %v965 = vadd.f32 %v958, %v964
        %966 = vrot.lane.b32.xlu0 %v862, 113
        %v967 = vpop.permute.xlu0 %966
        %s968 = vtos %v967
        %v969 = vstv %s968
        %v971 = vmul.f32 %v969, %v745
        %v972 = vadd.f32 %v965, %v971
        %973 = vst.msk [vmem:[%s860] sm:$0xf] %vm858, %v972
        %s974 = scalar_lea.vmem [#allocation4], 8
        %v975 = vld [vmem:[%s974] sm:$0xf]
        %v976 = vrot.slane %v624, 2
        %s977 = vtos %v976
        %v978 = vstv %s977
        %v980 = vmul.f32 %v978, %v623
        %v981 = vadd.f32 %v975, %v980
        %982 = vrot.lane.b32.xlu0 %v976, 127
        %v983 = vpop.permute.xlu0 %982
        %s984 = vtos %v983
        %v985 = vstv %s984
        %v987 = vmul.f32 %v985, %v633
        %v988 = vadd.f32 %v981, %v987
        %989 = vrot.lane.b32.xlu0 %v976, 126
        %v990 = vpop.permute.xlu0 %989
        %s991 = vtos %v990
        %v992 = vstv %s991
        %v994 = vmul.f32 %v992, %v641
        %v995 = vadd.f32 %v988, %v994
        %996 = vrot.lane.b32.xlu0 %v976, 125
        %v997 = vpop.permute.xlu0 %996
        %s998 = vtos %v997
        %v999 = vstv %s998
        %v1001 = vmul.f32 %v999, %v649
        %v1002 = vadd.f32 %v995, %v1001
        %1003 = vrot.lane.b32.xlu0 %v976, 124
        %v1004 = vpop.permute.xlu0 %1003
        %s1005 = vtos %v1004
        %v1006 = vstv %s1005
        %v1008 = vmul.f32 %v1006, %v657
        %v1009 = vadd.f32 %v1002, %v1008
        %1010 = vrot.lane.b32.xlu0 %v976, 123
        %v1011 = vpop.permute.xlu0 %1010
        %s1012 = vtos %v1011
        %v1013 = vstv %s1012
        %v1015 = vmul.f32 %v1013, %v665
        %v1016 = vadd.f32 %v1009, %v1015
        %1017 = vrot.lane.b32.xlu0 %v976, 122
        %v1018 = vpop.permute.xlu0 %1017
        %s1019 = vtos %v1018
        %v1020 = vstv %s1019
        %v1022 = vmul.f32 %v1020, %v673
        %v1023 = vadd.f32 %v1016, %v1022
        %1024 = vrot.lane.b32.xlu0 %v976, 121
        %v1025 = vpop.permute.xlu0 %1024
        %s1026 = vtos %v1025
        %v1027 = vstv %s1026
        %v1029 = vmul.f32 %v1027, %v681
        %v1030 = vadd.f32 %v1023, %v1029
        %1031 = vrot.lane.b32.xlu0 %v976, 120
        %v1032 = vpop.permute.xlu0 %1031
        %s1033 = vtos %v1032
        %v1034 = vstv %s1033
        %v1036 = vmul.f32 %v1034, %v689
        %v1037 = vadd.f32 %v1030, %v1036
        %1038 = vrot.lane.b32.xlu0 %v976, 119
        %v1039 = vpop.permute.xlu0 %1038
        %s1040 = vtos %v1039
        %v1041 = vstv %s1040
        %v1043 = vmul.f32 %v1041, %v697
        %v1044 = vadd.f32 %v1037, %v1043
        %1045 = vrot.lane.b32.xlu0 %v976, 118
        %v1046 = vpop.permute.xlu0 %1045
        %s1047 = vtos %v1046
        %v1048 = vstv %s1047
        %v1050 = vmul.f32 %v1048, %v705
        %v1051 = vadd.f32 %v1044, %v1050
        %1052 = vrot.lane.b32.xlu0 %v976, 117
        %v1053 = vpop.permute.xlu0 %1052
        %s1054 = vtos %v1053
        %v1055 = vstv %s1054
        %v1057 = vmul.f32 %v1055, %v713
        %v1058 = vadd.f32 %v1051, %v1057
        %1059 = vrot.lane.b32.xlu0 %v976, 116
        %v1060 = vpop.permute.xlu0 %1059
        %s1061 = vtos %v1060
        %v1062 = vstv %s1061
        %v1064 = vmul.f32 %v1062, %v721
        %v1065 = vadd.f32 %v1058, %v1064
        %1066 = vrot.lane.b32.xlu0 %v976, 115
        %v1067 = vpop.permute.xlu0 %1066
        %s1068 = vtos %v1067
        %v1069 = vstv %s1068
        %v1071 = vmul.f32 %v1069, %v729
        %v1072 = vadd.f32 %v1065, %v1071
        %1073 = vrot.lane.b32.xlu0 %v976, 114
        %v1074 = vpop.permute.xlu0 %1073
        %s1075 = vtos %v1074
        %v1076 = vstv %s1075
        %v1078 = vmul.f32 %v1076, %v737
        %v1079 = vadd.f32 %v1072, %v1078
        %1080 = vrot.lane.b32.xlu0 %v976, 113
        %v1081 = vpop.permute.xlu0 %1080
        %s1082 = vtos %v1081
        %v1083 = vstv %s1082
        %v1085 = vmul.f32 %v1083, %v745
        %v1086 = vadd.f32 %v1079, %v1085
        %1087 = vst.msk [vmem:[%s974] sm:$0xf] %vm858, %v1086
        %s1088 = scalar_lea.vmem [#allocation4], 12
        %v1089 = vld [vmem:[%s1088] sm:$0xf]
        %v1090 = vrot.slane %v624, 3
        %s1091 = vtos %v1090
        %v1092 = vstv %s1091
        %v1094 = vmul.f32 %v1092, %v623
        %v1095 = vadd.f32 %v1089, %v1094
        %1096 = vrot.lane.b32.xlu0 %v1090, 127
        %v1097 = vpop.permute.xlu0 %1096
        %s1098 = vtos %v1097
        %v1099 = vstv %s1098
        %v1101 = vmul.f32 %v1099, %v633
        %v1102 = vadd.f32 %v1095, %v1101
        %1103 = vrot.lane.b32.xlu0 %v1090, 126
        %v1104 = vpop.permute.xlu0 %1103
        %s1105 = vtos %v1104
        %v1106 = vstv %s1105
        %v1108 = vmul.f32 %v1106, %v641
        %v1109 = vadd.f32 %v1102, %v1108
        %1110 = vrot.lane.b32.xlu0 %v1090, 125
        %v1111 = vpop.permute.xlu0 %1110
        %s1112 = vtos %v1111
        %v1113 = vstv %s1112
        %v1115 = vmul.f32 %v1113, %v649
        %v1116 = vadd.f32 %v1109, %v1115
        %1117 = vrot.lane.b32.xlu0 %v1090, 124
        %v1118 = vpop.permute.xlu0 %1117
        %s1119 = vtos %v1118
        %v1120 = vstv %s1119
        %v1122 = vmul.f32 %v1120, %v657
        %v1123 = vadd.f32 %v1116, %v1122
        %1124 = vrot.lane.b32.xlu0 %v1090, 123
        %v1125 = vpop.permute.xlu0 %1124
        %s1126 = vtos %v1125
        %v1127 = vstv %s1126
        %v1129 = vmul.f32 %v1127, %v665
        %v1130 = vadd.f32 %v1123, %v1129
        %1131 = vrot.lane.b32.xlu0 %v1090, 122
        %v1132 = vpop.permute.xlu0 %1131
        %s1133 = vtos %v1132
        %v1134 = vstv %s1133
        %v1136 = vmul.f32 %v1134, %v673
        %v1137 = vadd.f32 %v1130, %v1136
        %1138 = vrot.lane.b32.xlu0 %v1090, 121
        %v1139 = vpop.permute.xlu0 %1138
        %s1140 = vtos %v1139
        %v1141 = vstv %s1140
        %v1143 = vmul.f32 %v1141, %v681
        %v1144 = vadd.f32 %v1137, %v1143
        %1145 = vrot.lane.b32.xlu0 %v1090, 120
        %v1146 = vpop.permute.xlu0 %1145
        %s1147 = vtos %v1146
        %v1148 = vstv %s1147
        %v1150 = vmul.f32 %v1148, %v689
        %v1151 = vadd.f32 %v1144, %v1150
        %1152 = vrot.lane.b32.xlu0 %v1090, 119
        %v1153 = vpop.permute.xlu0 %1152
        %s1154 = vtos %v1153
        %v1155 = vstv %s1154
        %v1157 = vmul.f32 %v1155, %v697
        %v1158 = vadd.f32 %v1151, %v1157
        %1159 = vrot.lane.b32.xlu0 %v1090, 118
        %v1160 = vpop.permute.xlu0 %1159
        %s1161 = vtos %v1160
        %v1162 = vstv %s1161
        %v1164 = vmul.f32 %v1162, %v705
        %v1165 = vadd.f32 %v1158, %v1164
        %1166 = vrot.lane.b32.xlu0 %v1090, 117
        %v1167 = vpop.permute.xlu0 %1166
        %s1168 = vtos %v1167
        %v1169 = vstv %s1168
        %v1171 = vmul.f32 %v1169, %v713
        %v1172 = vadd.f32 %v1165, %v1171
        %1173 = vrot.lane.b32.xlu0 %v1090, 116
        %v1174 = vpop.permute.xlu0 %1173
        %s1175 = vtos %v1174
        %v1176 = vstv %s1175
        %v1178 = vmul.f32 %v1176, %v721
        %v1179 = vadd.f32 %v1172, %v1178
        %1180 = vrot.lane.b32.xlu0 %v1090, 115
        %v1181 = vpop.permute.xlu0 %1180
        %s1182 = vtos %v1181
        %v1183 = vstv %s1182
        %v1185 = vmul.f32 %v1183, %v729
        %v1186 = vadd.f32 %v1179, %v1185
        %1187 = vrot.lane.b32.xlu0 %v1090, 114
        %v1188 = vpop.permute.xlu0 %1187
        %s1189 = vtos %v1188
        %v1190 = vstv %s1189
        %v1192 = vmul.f32 %v1190, %v737
        %v1193 = vadd.f32 %v1186, %v1192
        %1194 = vrot.lane.b32.xlu0 %v1090, 113
        %v1195 = vpop.permute.xlu0 %1194
        %s1196 = vtos %v1195
        %v1197 = vstv %s1196
        %v1199 = vmul.f32 %v1197, %v745
        %v1200 = vadd.f32 %v1193, %v1199
        %1201 = vst.msk [vmem:[%s1088] sm:$0xf] %vm858, %v1200
        %1202 = vrot.lane.b32.xlu0 %v623, 80
        %v1203 = vpop.permute.xlu0 %1202
        %1205 = vrot.lane.b32.xlu0 %v623, 16
        %v1206 = vpop.permute.xlu0 %1205
        %vm1208 = vcmask 130048
        %v1209 = vsel %vm1208, %v1203, %v1206
        %1210 = vst.msk [vmem:[#allocation2] sm:$0xf] %vm858, %v1209
        %1211 = vrot.lane.b32.xlu0 %v624, 112
        %v1212 = vpop.permute.xlu0 %1211
        %1214 = vrot.lane.b32.xlu0 %v624, 48
        %v1215 = vpop.permute.xlu0 %1214
        %vm1217 = vcmask 392192
        %v1218 = vsel %vm1217, %v1212, %v1215
        %1219 = vst.msk [vmem:[#allocation3] sm:$0xf] %vm858, %v1218
        %p1220 = scmp.eq.s32.totalorder %s22, 3
        // Predicated region
        $region37: #{cooc_layer.1} parent=27 // pred_check
          %p1221 = pneg %p1220
        $region38: #{cooc_layer.1} parent=27 // pred_check_branch
          %1223 = sbr.rel (%p1221) target = $region40
        $region39: #{cooc_layer.1} parent=27 // pred_region
          %v1224 = vld [vmem:[#allocation4] sm:$0xf]
          %v1225 = vld [vmem:[#allocation4 + $0x4] sm:$0xf]
          %v1226 = vld [vmem:[#allocation4 + $0x8] sm:$0xf]
          %v1227 = vld [vmem:[#allocation4 + $0xc] sm:$0xf]
          %v1228 = vsel %vm858, %v1224, -inf
          %v1229 = vsel %vm858, %v1225, -inf
          %v1230 = vsel %vm858, %v1226, -inf
          %v1231 = vsel %vm858, %v1227, -inf
          %v1232 = vmax.f32 %v1228, %v1229
          %v1233 = vmax.f32 %v1230, %v1231
          %v1234 = vmax.f32 %v1232, %v1233
          %v1235 = vsel %vm858, %v1234, -inf
          %v1236 = vrot.slane %v1235, 4
          %v1237 = vmax.f32 %v1235, %v1236
          %v1238 = vrot.slane %v1237, 2
          %v1239 = vmax.f32 %v1237, %v1238
          %v1240 = vrot.slane %v1239, 1
          %v1241 = vmax.f32 %v1239, %v1240
          %1243 = vrot.lane.b32.xlu0 %v1241, 112
          %v1244 = vpop.permute.xlu0 %1243
          %v1246 = vmax.f32 %v1241, %v1244
          %1247 = vrot.lane.b32.xlu0 %v1241, 96
          %v1248 = vpop.permute.xlu0 %1247
          %v1250 = vmax.f32 %v1246, %v1248
          %1251 = vrot.lane.b32.xlu0 %v1241, 80
          %v1252 = vpop.permute.xlu0 %1251
          %v1254 = vmax.f32 %v1250, %v1252
          %v1255 = vrsqrt.pop %v1254
          %v1256 = vmul.f32 %v1254, %v1255
          %vm1257 = vcmp.eq.f32.partialorder %v1254, inf
          %v1258 = vsel %vm1257, %v1254, %v1256
          %vm1259 = vcmp.eq.f32.partialorder %v1254, 0.0
          %v1260 = vand.u32 %v1254, 2147483648
          %v1261 = vsel %vm1259, %v1260, %v1258
          %v1262 = vmul.f32 %v1261, %v1261
          %vm1263 = vcmask 122880
          %v1264 = vsel %vm1263, %v1262, 0.0
          %1265 = vadd.xlane.f32.xlu0 %v1264
          %v1266 = vpop.xlane.xlu0 %1265
          %v1267 = vadd.f32 %v1266, 1e-11
          %v1268 = vrcp.pop %v1267
          %v1269 = vmul.f32 %v1261, %v1268
          %1270 = vst.msk [vmem:[%s161] sm:$0x1] %vm1263, %v1269
        $region40: #{cooc_layer.1} parent=27 // pred_fallthru
          _
        %s1271 = sand.u32 %s84, 1
        %s1272 = scalar_lea.sflag [#allocation6], %s1271
        %s1273 = sand.u32 %s84, 1
        %s1274 = scalar_lea.vmem [#allocation8], %s1273
        // Predicated region
        $region41: #{cooc_layer.1} parent=27 // pred_check
          %p1275 = pneg %p94
        $region42: #{cooc_layer.1} parent=27 // pred_check_branch
          %1277 = sbr.rel (%p1275) target = $region44
        $region43: #{cooc_layer.1} parent=27 // pred_region
          %s1279 = ssub.s32 16, 16
          %1280 = vsyncadd %s1272, %s1279
          %s1281 = smul.addr %s21, 16
          %s1282 = scalar_lea.hbm %s2, %s1281
          %s1284 = sshll.u32 %s1274, 4
          %s1285 = int_to_ptr.vmem [resolvable:$true] %s1284
          %1287 = dma.vmem_to_hbm [thread:$0]  %s1285, 16, %s1282, %s1272
        $region44: #{cooc_layer.1} parent=27 // pred_fallthru
          _
      $region28: #{cooc_layer.1} parent=5 // pred_fallthru
        _
      %p1288 = scmp.le.s32.totalorder 2, %s12
      // Predicated region
      $region45: #{cooc_layer.1} parent=5 // pred_check
        %p1289 = pneg %p1288
      $region46: #{cooc_layer.1} parent=5 // pred_check_branch
        %1291 = sbr.rel (%p1289) target = $region48
      $region47: #{cooc_layer.1} parent=5 // pred_region
        %s1292 = ssub.s32 %s12, 2
        // Predicated region
        $region49: #{cooc_layer.1} parent=47 // pred_check
          %p1293 = pneg %p100
        $region50: #{cooc_layer.1} parent=47 // pred_check_branch
          %1295 = sbr.rel (%p1293) target = $region52
        $region51: #{cooc_layer.1} parent=47 // pred_region
          %s1296 = sand.u32 %s85, 1
          %s1297 = scalar_lea.sflag [#allocation6], %s1296
          %s1298 = sand.u32 %s85, 1
          %s1299 = scalar_lea.vmem [#allocation8], %s1298
          %1300 = dma.done %s1297, 16
        $region52: #{cooc_layer.1} parent=47 // pred_fallthru
          _
      $region48: #{cooc_layer.1} parent=5 // pred_fallthru
        _
    $region6: #{cooc_layer.1} parent=1 // loop_footer
      %s16 = sadd.s32 1, %s12
    $region7: #{cooc_layer.1} parent=1 // loop_footer_branch
      %11 = sbr.rel target = $region3
    $region8: #{cooc_layer.1} parent=1 // loop_exit
      _
    %1301 = vsyncpa [#allocation6], 1
    %s1302 = scalar_lea.sflag [#allocation6], 1
    %1303 = vsyncpa %s1302, 1
    %1304 = vsyncpa [#allocation7], 1
    %s1305 = scalar_lea.sflag [#allocation7], 1
    %1306 = vsyncpa %s1305, 1

</llo_original>
